<compile_context>
chip_gen: v5e
topology: v5e:2x2
jax: 0.10.0
libtpu: 0.0.40
codegen_flags: <defaults>
</compile_context>

<pallas_src>
import functools
from typing import NamedTuple

import jax
import jax.numpy as jnp
from jax import lax
from jax.experimental import pallas as pl
from jax.experimental.pallas import tpu as pltpu

SUBLANE = 8


# ----------------------------------------------------------------------------
# Small helpers
# ----------------------------------------------------------------------------
def _round_up(n: int, m: int) -> int:
    return ((n + m - 1) // m) * m


def _cdiv(a: int, b: int) -> int:
    return -(-a // b)


def _pad2d(a, rows, cols):
    return jnp.pad(a, ((0, rows - a.shape[0]), (0, cols - a.shape[1])))


def _device_kind() -> str:
    try:
        return jax.devices()[0].device_kind.lower()
    except Exception:
        return ""


def _feature_align() -> int:
    # v6e / v7x have 2x256x256 MXUs -> 256-aligned features; 128 elsewhere.
    kind = _device_kind()
    return 256 if ("v6" in kind or "v7" in kind) else 128


def _vmem_capacity_bytes() -> int:
    try:
        return int(pltpu.get_tpu_info().vmem_capacity_bytes)
    except Exception:
        return 64 << 20          # conservative (v7x per-TC VMEM)


def _resident_spec(shape, single_buffer: bool):
    """BlockSpec for an operand whose block never changes across the grid."""
    if single_buffer:
        try:
            return pl.BlockSpec(shape, lambda i: (0, 0),
                                pipeline_mode=pl.Buffered(1))
        except Exception:
            pass                  # older builds: fall back to default buffering
    return pl.BlockSpec(shape, lambda i: (0, 0))


# ----------------------------------------------------------------------------
# Fused forward kernel (one batch tile per grid step, num_layers = 2).
# ----------------------------------------------------------------------------
def mlp_kernel(x_ref,
               w_in_ref, b_in_ref,
               w1_ref, b1_ref, g1_ref, be1_ref,
               w2_ref, b2_ref, g2_ref, be2_ref,
               w_out_ref, b_out_ref,
               o_ref,
               *, hidden_dim: int, eps: float = 1e-5):
    inv_n = 1.0 / float(hidden_dim)       # real (unpadded) LayerNorm width

    # input_fc + ReLU   (bf16 MXU inputs, f32 accumulation)
    h = jnp.dot(x_ref[...], w_in_ref[...],
                preferred_element_type=jnp.float32) + b_in_ref[...]
    h = jnp.maximum(h, 0.0).astype(jnp.bfloat16)

    # hidden blocks: Linear -> LayerNorm -> ReLU
    for w_r, b_r, g_r, be_r in ((w1_ref, b1_ref, g1_ref, be1_ref),
                                (w2_ref, b2_ref, g2_ref, be2_ref)):
        y = jnp.dot(h, w_r[...], preferred_element_type=jnp.float32) + b_r[...]
        # Padded lanes of y are exactly zero (zero-padded weights/bias), so
        # full-width sums equal sums over the real hidden_dim features.
        s1 = jnp.sum(y, axis=-1, keepdims=True)
        s2 = jnp.sum(y * y, axis=-1, keepdims=True)
        mu = s1 * inv_n
        var = jnp.maximum(s2 * inv_n - mu * mu, 0.0)
        y = (y - mu) * lax.rsqrt(var + eps)
        y = y * g_r[...] + be_r[...]              # padded gamma/beta are zero
        h = jnp.maximum(y, 0.0).astype(jnp.bfloat16)

    # output_fc (no activation)
    out = jnp.dot(h, w_out_ref[...],
                  preferred_element_type=jnp.float32) + b_out_ref[...]
    o_ref[...] = out.astype(o_ref.dtype)


# ----------------------------------------------------------------------------
# One-time parameter preparation (pad + cast + keep on device).
# ----------------------------------------------------------------------------
class Prepared(NamedTuple):
    args: tuple          # 12 padded, device-resident operands
    in_dim: int
    hidden_dim: int
    out_dim: int
    Fi: int
    H: int
    Fo: int


def prepare_params(params) -> Prepared:
    (w_in, b_in, w1, b1, g1, be1, w2, b2, g2, be2, w_out, b_out) = params
    in_dim, hidden_dim = w_in.shape
    out_dim = w_out.shape[1]

    align = _feature_align()
    Fi = _round_up(in_dim, align)
    H = _round_up(hidden_dim, align)
    Fo = _round_up(out_dim, align)

    def pw(w, r, c):                                   # weights -> bf16
        return _pad2d(jnp.asarray(w, jnp.float32), r, c).astype(jnp.bfloat16)

    def pv(v, c):                                      # bias / gamma / beta -> f32
        return _pad2d(jnp.asarray(v, jnp.float32).reshape(1, -1), 1, c)

    args = (
        pw(w_in, Fi, H), pv(b_in, H),
        pw(w1, H, H), pv(b1, H), pv(g1, H), pv(be1, H),
        pw(w2, H, H), pv(b2, H), pv(g2, H), pv(be2, H),
        pw(w_out, H, Fo), pv(b_out, Fo),
    )
    args = tuple(jax.device_put(jax.block_until_ready(a)) for a in args)
    return Prepared(args, in_dim, hidden_dim, out_dim, Fi, H, Fo)


# ----------------------------------------------------------------------------
# Cached, jitted forward builder for a given (batch, dims) configuration.
# ----------------------------------------------------------------------------
@functools.lru_cache(maxsize=None)
def _build_forward(B, in_dim, hidden_dim, out_dim, Fi, H, Fo, single_buffer):
    kind = _device_kind()
    is_v7 = "v7" in kind
    tm_cap = 256 if is_v7 else 512          # bigger tiles on 128 MiB-VMEM chips

    # ---- balanced batch tiling ---------------------------------------------
    nb = max(_cdiv(B, tm_cap), 1)
    if is_v7 and nb == 1 and B > SUBLANE:
        nb = 2                               # keep both v7x TensorCores busy
    TM = _round_up(_cdiv(B, nb), SUBLANE)
    B_pad = TM * nb

    # ---- resident operand shapes / itemsizes (matches prepare_params order) -
    res = [((Fi, H), 2), ((1, H), 4),
           ((H, H), 2), ((1, H), 4), ((1, H), 4), ((1, H), 4),
           ((H, H), 2), ((1, H), 4), ((1, H), 4), ((1, H), 4),
           ((H, Fo), 2), ((1, Fo), 4)]

    in_specs = [pl.BlockSpec((TM, Fi), lambda i: (i, 0))]
    in_specs += [_resident_spec(shape, single_buffer) for shape, _ in res]
    out_spec = pl.BlockSpec((TM, Fo), lambda i: (i, 0))

    # ---- generation-aware VMEM budget ---------------------------------------
    w_bytes_once = sum(s[0] * s[1] * isz for s, isz in res)
    w_bytes_res = w_bytes_once * (1 if single_buffer else 2)
    act_bytes = 2 * (TM * Fi * 2 + TM * Fo * 4)          # double-buffered x / out
    scratch_bytes = 3 * TM * H * 4                        # f32 intermediates
    cap = _vmem_capacity_bytes()
    vmem_limit = int(min(
        max(int(1.5 * (w_bytes_res + act_bytes + scratch_bytes)), 16 << 20),
        max(cap - (8 << 20), 16 << 20)))

    # ---- cost hint ----------------------------------------------------------
    flops = 2 * B_pad * (Fi * H + 2 * H * H + H * Fo)
    cost = pl.CostEstimate(
        flops=int(flops),
        transcendentals=int(2 * B_pad),                   # one rsqrt / row / LN
        bytes_accessed=int(w_bytes_once + B_pad * Fi * 2 + B_pad * Fo * 4))

    kernel = functools.partial(mlp_kernel, hidden_dim=hidden_dim)

    call = pl.pallas_call(
        kernel,
        out_shape=jax.ShapeDtypeStruct((B_pad, Fo), jnp.float32),
        grid=(nb,),
        in_specs=in_specs,
        out_specs=out_spec,
        compiler_params=pltpu.CompilerParams(
            dimension_semantics=("parallel",),
            vmem_limit_bytes=vmem_limit),
        cost_estimate=cost,
    )

    def fwd(x, *w_args):
        x_p = _pad2d(x, B_pad, Fi).astype(jnp.bfloat16)
        out_p = call(x_p, *w_args)
        return out_p[:B, :out_dim]

    return jax.jit(fwd)


_SINGLE_BUFFER_OK = True


def mlp_forward(x, prepared: Prepared):
    """Forward pass; weights must already be prepared via prepare_params()."""
    global _SINGLE_BUFFER_OK
    B = int(x.shape[0])
    key = (B, prepared.in_dim, prepared.hidden_dim, prepared.out_dim,
           prepared.Fi, prepared.H, prepared.Fo)
    if _SINGLE_BUFFER_OK:
        try:
            return _build_forward(*key, True)(x, *prepared.args)
        except Exception:
            _SINGLE_BUFFER_OK = False        # degrade to double-buffered weights
    return _build_forward(*key, False)(x, *prepared.args)


# ----------------------------------------------------------------------------
# Deterministic parameter init (mirrors MLPModel._init_weights semantics).
# Weights are stored pre-transposed as [in_features, out_features].
# ----------------------------------------------------------------------------
def _orthogonal(key, rows, cols, gain):
    a = jax.random.normal(key, (max(rows, cols), min(rows, cols)), jnp.float32)
    q, r = jnp.linalg.qr(a)
    q = q * jnp.sign(jnp.diagonal(r))
    if rows < cols:
        q = q.T
    return gain * q[:rows, :cols]


def make_params(key, in_dim, hidden_dim, out_dim):
    ks = jax.random.split(key, 4)
    relu_gain = jnp.sqrt(2.0)

    # input_fc: PyTorch-default-style uniform init
    bound = 1.0 / jnp.sqrt(in_dim)
    w_in = jax.random.uniform(ks[0], (in_dim, hidden_dim), jnp.float32, -bound, bound)
    b_in = jnp.zeros((1, hidden_dim), jnp.float32)

    # hidden fcs: orthogonal with relu gain, zero bias
    w1 = _orthogonal(ks[1], hidden_dim, hidden_dim, relu_gain).T
    b1 = jnp.zeros((1, hidden_dim), jnp.float32)
    w2 = _orthogonal(ks[2], hidden_dim, hidden_dim, relu_gain).T
    b2 = jnp.zeros((1, hidden_dim), jnp.float32)

    # LayerNorm params at init
    g1 = jnp.ones((1, hidden_dim), jnp.float32)
    be1 = jnp.zeros((1, hidden_dim), jnp.float32)
    g2 = jnp.ones((1, hidden_dim), jnp.float32)
    be2 = jnp.zeros((1, hidden_dim), jnp.float32)

    # output_fc: orthogonal with gain 1.0, zero bias
    w_out = _orthogonal(ks[3], out_dim, hidden_dim, 1.0).T
    b_out = jnp.zeros((1, out_dim), jnp.float32)

    return (w_in, b_in, w1, b1, g1, be1, w2, b2, g2, be2, w_out, b_out)


# Pure-f32 JAX reference (matches the PyTorch module semantics).
def mlp_reference(x, params):
    (w_in, b_in, w1, b1, g1, be1, w2, b2, g2, be2, w_out, b_out) = params
    h = jnp.maximum(x @ w_in + b_in, 0.0)
    for w, b, g, be in ((w1, b1, g1, be1), (w2, b2, g2, be2)):
        y = h @ w + b
        mu = jnp.mean(y, axis=-1, keepdims=True)
        var = jnp.mean((y - mu) ** 2, axis=-1, keepdims=True)
        y = (y - mu) / jnp.sqrt(var + 1e-5) * g + be
        h = jnp.maximum(y, 0.0)
    return h @ w_out + b_out


if __name__ == "__main__":
    key = jax.random.PRNGKey(0)
    k_x, k_p = jax.random.split(key)

    batch, in_dim, hidden_dim, out_dim = 8, 16, 32, 8
    x = jax.random.normal(k_x, (batch, in_dim), jnp.float32)
    params = make_params(k_p, in_dim, hidden_dim, out_dim)

    prepared = prepare_params(params)           # one-time pad + bf16 cast
    out = mlp_forward(x, prepared)
    out = jax.block_until_ready(out)

    ref = mlp_reference(x, params)
    assert out.shape == (batch, out_dim)
    # bf16 MXU inputs (f32 accumulation) vs pure-f32 reference -> loosened tol.
    assert jnp.allclose(out, ref, atol=5e-2, rtol=5e-2), "mismatch vs reference"

    print("KERNEL_OK")
</pallas_src>

<mosaic_0001>
module attributes {stable_mosaic.version = 11 : i64} {
  func.func @mlp_kernel(%arg0: i32, %arg1: memref<8x128xbf16, #tpu.memory_space<vmem>>, %arg2: memref<128x128xbf16, #tpu.memory_space<vmem>>, %arg3: memref<1x128xf32, #tpu.memory_space<vmem>>, %arg4: memref<128x128xbf16, #tpu.memory_space<vmem>>, %arg5: memref<1x128xf32, #tpu.memory_space<vmem>>, %arg6: memref<1x128xf32, #tpu.memory_space<vmem>>, %arg7: memref<1x128xf32, #tpu.memory_space<vmem>>, %arg8: memref<128x128xbf16, #tpu.memory_space<vmem>>, %arg9: memref<1x128xf32, #tpu.memory_space<vmem>>, %arg10: memref<1x128xf32, #tpu.memory_space<vmem>>, %arg11: memref<1x128xf32, #tpu.memory_space<vmem>>, %arg12: memref<128x128xbf16, #tpu.memory_space<vmem>>, %arg13: memref<1x128xf32, #tpu.memory_space<vmem>>, %arg14: memref<8x128xf32, #tpu.memory_space<vmem>>) attributes {dimension_semantics = [#tpu.dimension_semantics<parallel>], iteration_bounds = array<i64: 1>, scalar_prefetch = 0 : i64, scratch_operands = 0 : i64, tpu.core_type = #tpu.core_type<tc>, window_params = [{transform_indices = @transform_0, window_bounds = array<i64: 8, 128>}, {pipeline_mode = #tpu.pipeline_mode<synchronous>, transform_indices = @transform_1, window_bounds = array<i64: 128, 128>}, {pipeline_mode = #tpu.pipeline_mode<synchronous>, transform_indices = @transform_2, window_bounds = array<i64: 1, 128>}, {pipeline_mode = #tpu.pipeline_mode<synchronous>, transform_indices = @transform_3, window_bounds = array<i64: 128, 128>}, {pipeline_mode = #tpu.pipeline_mode<synchronous>, transform_indices = @transform_4, window_bounds = array<i64: 1, 128>}, {pipeline_mode = #tpu.pipeline_mode<synchronous>, transform_indices = @transform_5, window_bounds = array<i64: 1, 128>}, {pipeline_mode = #tpu.pipeline_mode<synchronous>, transform_indices = @transform_6, window_bounds = array<i64: 1, 128>}, {pipeline_mode = #tpu.pipeline_mode<synchronous>, transform_indices = @transform_7, window_bounds = array<i64: 128, 128>}, {pipeline_mode = #tpu.pipeline_mode<synchronous>, transform_indices = @transform_8, window_bounds = array<i64: 1, 128>}, {pipeline_mode = #tpu.pipeline_mode<synchronous>, transform_indices = @transform_9, window_bounds = array<i64: 1, 128>}, {pipeline_mode = #tpu.pipeline_mode<synchronous>, transform_indices = @transform_10, window_bounds = array<i64: 1, 128>}, {pipeline_mode = #tpu.pipeline_mode<synchronous>, transform_indices = @transform_11, window_bounds = array<i64: 128, 128>}, {pipeline_mode = #tpu.pipeline_mode<synchronous>, transform_indices = @transform_12, window_bounds = array<i64: 1, 128>}, {transform_indices = @transform_13, window_bounds = array<i64: 8, 128>}]} {
    %c0 = arith.constant 0 : index
    %c0_0 = arith.constant 0 : index
    %0 = vector.load %arg1[%c0, %c0_0] : memref<8x128xbf16, #tpu.memory_space<vmem>>, vector<8x128xbf16>
    %c0_1 = arith.constant 0 : index
    %c0_2 = arith.constant 0 : index
    %1 = vector.load %arg2[%c0_1, %c0_2] : memref<128x128xbf16, #tpu.memory_space<vmem>>, vector<128x128xbf16>
    %cst = arith.constant dense<0.000000e+00> : vector<8x128xf32>
    %2 = tpu.matmul %0, %1, %cst {dimension_numbers = #tpu.dot_dimension_numbers<[1], [0], [0], [1], [0, 0, 1, 1], [], []>} : vector<8x128xbf16>, vector<128x128xbf16>, vector<8x128xf32> -> vector<8x128xf32>
    %c0_3 = arith.constant 0 : index
    %c0_4 = arith.constant 0 : index
    %3 = vector.load %arg3[%c0_3, %c0_4] : memref<1x128xf32, #tpu.memory_space<vmem>>, vector<1x128xf32>
    %4 = vector.broadcast %3 : vector<1x128xf32> to vector<8x128xf32>
    %5 = arith.addf %2, %4 : vector<8x128xf32>
    %cst_5 = arith.constant 0.000000e+00 : f32
    %6 = vector.broadcast %cst_5 : f32 to vector<8x128xf32>
    %7 = arith.maximumf %5, %6 : vector<8x128xf32>
    %8 = arith.truncf %7 : vector<8x128xf32> to vector<8x128xbf16>
    %c0_6 = arith.constant 0 : index
    %c0_7 = arith.constant 0 : index
    %9 = vector.load %arg4[%c0_6, %c0_7] : memref<128x128xbf16, #tpu.memory_space<vmem>>, vector<128x128xbf16>
    %cst_8 = arith.constant dense<0.000000e+00> : vector<8x128xf32>
    %10 = tpu.matmul %8, %9, %cst_8 {dimension_numbers = #tpu.dot_dimension_numbers<[1], [0], [0], [1], [0, 0, 1, 1], [], []>} : vector<8x128xbf16>, vector<128x128xbf16>, vector<8x128xf32> -> vector<8x128xf32>
    %c0_9 = arith.constant 0 : index
    %c0_10 = arith.constant 0 : index
    %11 = vector.load %arg5[%c0_9, %c0_10] : memref<1x128xf32, #tpu.memory_space<vmem>>, vector<1x128xf32>
    %12 = vector.broadcast %11 : vector<1x128xf32> to vector<8x128xf32>
    %13 = arith.addf %10, %12 : vector<8x128xf32>
    %cst_11 = arith.constant dense<0.000000e+00> : vector<8xf32>
    %14 = vector.multi_reduction <add>, %13, %cst_11 [1] : vector<8x128xf32> to vector<8xf32>
    %15 = vector.shape_cast %14 : vector<8xf32> to vector<8x1xf32>
    %16 = arith.mulf %13, %13 : vector<8x128xf32>
    %cst_12 = arith.constant dense<0.000000e+00> : vector<8xf32>
    %17 = vector.multi_reduction <add>, %16, %cst_12 [1] : vector<8x128xf32> to vector<8xf32>
    %18 = vector.shape_cast %17 : vector<8xf32> to vector<8x1xf32>
    %cst_13 = arith.constant 3.125000e-02 : f32
    %19 = vector.broadcast %cst_13 : f32 to vector<8x1xf32>
    %20 = arith.mulf %15, %19 : vector<8x1xf32>
    %cst_14 = arith.constant 3.125000e-02 : f32
    %21 = vector.broadcast %cst_14 : f32 to vector<8x1xf32>
    %22 = arith.mulf %18, %21 : vector<8x1xf32>
    %23 = arith.mulf %20, %20 : vector<8x1xf32>
    %24 = arith.subf %22, %23 : vector<8x1xf32>
    %cst_15 = arith.constant 0.000000e+00 : f32
    %25 = vector.broadcast %cst_15 : f32 to vector<8x1xf32>
    %26 = arith.maximumf %24, %25 : vector<8x1xf32>
    %27 = vector.broadcast %20 : vector<8x1xf32> to vector<8x128xf32>
    %28 = arith.subf %13, %27 : vector<8x128xf32>
    %cst_16 = arith.constant 9.99999974E-6 : f32
    %29 = vector.broadcast %cst_16 : f32 to vector<8x1xf32>
    %30 = arith.addf %26, %29 : vector<8x1xf32>
    %31 = math.rsqrt %30 : vector<8x1xf32>
    %32 = vector.broadcast %31 : vector<8x1xf32> to vector<8x128xf32>
    %33 = arith.mulf %28, %32 : vector<8x128xf32>
    %c0_17 = arith.constant 0 : index
    %c0_18 = arith.constant 0 : index
    %34 = vector.load %arg6[%c0_17, %c0_18] : memref<1x128xf32, #tpu.memory_space<vmem>>, vector<1x128xf32>
    %35 = vector.broadcast %34 : vector<1x128xf32> to vector<8x128xf32>
    %36 = arith.mulf %33, %35 : vector<8x128xf32>
    %c0_19 = arith.constant 0 : index
    %c0_20 = arith.constant 0 : index
    %37 = vector.load %arg7[%c0_19, %c0_20] : memref<1x128xf32, #tpu.memory_space<vmem>>, vector<1x128xf32>
    %38 = vector.broadcast %37 : vector<1x128xf32> to vector<8x128xf32>
    %39 = arith.addf %36, %38 : vector<8x128xf32>
    %cst_21 = arith.constant 0.000000e+00 : f32
    %40 = vector.broadcast %cst_21 : f32 to vector<8x128xf32>
    %41 = arith.maximumf %39, %40 : vector<8x128xf32>
    %42 = arith.truncf %41 : vector<8x128xf32> to vector<8x128xbf16>
    %c0_22 = arith.constant 0 : index
    %c0_23 = arith.constant 0 : index
    %43 = vector.load %arg8[%c0_22, %c0_23] : memref<128x128xbf16, #tpu.memory_space<vmem>>, vector<128x128xbf16>
    %cst_24 = arith.constant dense<0.000000e+00> : vector<8x128xf32>
    %44 = tpu.matmul %42, %43, %cst_24 {dimension_numbers = #tpu.dot_dimension_numbers<[1], [0], [0], [1], [0, 0, 1, 1], [], []>} : vector<8x128xbf16>, vector<128x128xbf16>, vector<8x128xf32> -> vector<8x128xf32>
    %c0_25 = arith.constant 0 : index
    %c0_26 = arith.constant 0 : index
    %45 = vector.load %arg9[%c0_25, %c0_26] : memref<1x128xf32, #tpu.memory_space<vmem>>, vector<1x128xf32>
    %46 = vector.broadcast %45 : vector<1x128xf32> to vector<8x128xf32>
    %47 = arith.addf %44, %46 : vector<8x128xf32>
    %cst_27 = arith.constant dense<0.000000e+00> : vector<8xf32>
    %48 = vector.multi_reduction <add>, %47, %cst_27 [1] : vector<8x128xf32> to vector<8xf32>
    %49 = vector.shape_cast %48 : vector<8xf32> to vector<8x1xf32>
    %50 = arith.mulf %47, %47 : vector<8x128xf32>
    %cst_28 = arith.constant dense<0.000000e+00> : vector<8xf32>
    %51 = vector.multi_reduction <add>, %50, %cst_28 [1] : vector<8x128xf32> to vector<8xf32>
    %52 = vector.shape_cast %51 : vector<8xf32> to vector<8x1xf32>
    %cst_29 = arith.constant 3.125000e-02 : f32
    %53 = vector.broadcast %cst_29 : f32 to vector<8x1xf32>
    %54 = arith.mulf %49, %53 : vector<8x1xf32>
    %cst_30 = arith.constant 3.125000e-02 : f32
    %55 = vector.broadcast %cst_30 : f32 to vector<8x1xf32>
    %56 = arith.mulf %52, %55 : vector<8x1xf32>
    %57 = arith.mulf %54, %54 : vector<8x1xf32>
    %58 = arith.subf %56, %57 : vector<8x1xf32>
    %cst_31 = arith.constant 0.000000e+00 : f32
    %59 = vector.broadcast %cst_31 : f32 to vector<8x1xf32>
    %60 = arith.maximumf %58, %59 : vector<8x1xf32>
    %61 = vector.broadcast %54 : vector<8x1xf32> to vector<8x128xf32>
    %62 = arith.subf %47, %61 : vector<8x128xf32>
    %cst_32 = arith.constant 9.99999974E-6 : f32
    %63 = vector.broadcast %cst_32 : f32 to vector<8x1xf32>
    %64 = arith.addf %60, %63 : vector<8x1xf32>
    %65 = math.rsqrt %64 : vector<8x1xf32>
    %66 = vector.broadcast %65 : vector<8x1xf32> to vector<8x128xf32>
    %67 = arith.mulf %62, %66 : vector<8x128xf32>
    %c0_33 = arith.constant 0 : index
    %c0_34 = arith.constant 0 : index
    %68 = vector.load %arg10[%c0_33, %c0_34] : memref<1x128xf32, #tpu.memory_space<vmem>>, vector<1x128xf32>
    %69 = vector.broadcast %68 : vector<1x128xf32> to vector<8x128xf32>
    %70 = arith.mulf %67, %69 : vector<8x128xf32>
    %c0_35 = arith.constant 0 : index
    %c0_36 = arith.constant 0 : index
    %71 = vector.load %arg11[%c0_35, %c0_36] : memref<1x128xf32, #tpu.memory_space<vmem>>, vector<1x128xf32>
    %72 = vector.broadcast %71 : vector<1x128xf32> to vector<8x128xf32>
    %73 = arith.addf %70, %72 : vector<8x128xf32>
    %cst_37 = arith.constant 0.000000e+00 : f32
    %74 = vector.broadcast %cst_37 : f32 to vector<8x128xf32>
    %75 = arith.maximumf %73, %74 : vector<8x128xf32>
    %76 = arith.truncf %75 : vector<8x128xf32> to vector<8x128xbf16>
    %c0_38 = arith.constant 0 : index
    %c0_39 = arith.constant 0 : index
    %77 = vector.load %arg12[%c0_38, %c0_39] : memref<128x128xbf16, #tpu.memory_space<vmem>>, vector<128x128xbf16>
    %cst_40 = arith.constant dense<0.000000e+00> : vector<8x128xf32>
    %78 = tpu.matmul %76, %77, %cst_40 {dimension_numbers = #tpu.dot_dimension_numbers<[1], [0], [0], [1], [0, 0, 1, 1], [], []>} : vector<8x128xbf16>, vector<128x128xbf16>, vector<8x128xf32> -> vector<8x128xf32>
    %c0_41 = arith.constant 0 : index
    %c0_42 = arith.constant 0 : index
    %79 = vector.load %arg13[%c0_41, %c0_42] : memref<1x128xf32, #tpu.memory_space<vmem>>, vector<1x128xf32>
    %80 = vector.broadcast %79 : vector<1x128xf32> to vector<8x128xf32>
    %81 = arith.addf %78, %80 : vector<8x128xf32>
    %c0_43 = arith.constant 0 : index
    %c0_44 = arith.constant 0 : index
    %82 = vector.load %arg14[%c0_43, %c0_44] : memref<8x128xf32, #tpu.memory_space<vmem>>, vector<8x128xf32>
    tpu.vector_store %arg14[%c0_43, %c0_44], %81 {strides = array<i32>} : memref<8x128xf32, #tpu.memory_space<vmem>>, vector<8x128xf32>,
    return
  }
  func.func @transform_0(%arg0: i32) -> (i32, i32) {
    %c0_i32 = arith.constant 0 : i32
    %c0_i32_0 = arith.constant 0 : i32
    return %arg0, %c0_i32 : i32, i32
  }
  func.func @transform_1(%arg0: i32) -> (i32, i32) {
    %c0_i32 = arith.constant 0 : i32
    %c0_i32_0 = arith.constant 0 : i32
    %c0_i32_1 = arith.constant 0 : i32
    return %c0_i32, %c0_i32_0 : i32, i32
  }
  func.func @transform_2(%arg0: i32) -> (i32, i32) {
    %c0_i32 = arith.constant 0 : i32
    %c0_i32_0 = arith.constant 0 : i32
    %c0_i32_1 = arith.constant 0 : i32
    return %c0_i32, %c0_i32_0 : i32, i32
  }
  func.func @transform_3(%arg0: i32) -> (i32, i32) {
    %c0_i32 = arith.constant 0 : i32
    %c0_i32_0 = arith.constant 0 : i32
    %c0_i32_1 = arith.constant 0 : i32
    return %c0_i32, %c0_i32_0 : i32, i32
  }
  func.func @transform_4(%arg0: i32) -> (i32, i32) {
    %c0_i32 = arith.constant 0 : i32
    %c0_i32_0 = arith.constant 0 : i32
    %c0_i32_1 = arith.constant 0 : i32
    return %c0_i32, %c0_i32_0 : i32, i32
  }
  func.func @transform_5(%arg0: i32) -> (i32, i32) {
    %c0_i32 = arith.constant 0 : i32
    %c0_i32_0 = arith.constant 0 : i32
    %c0_i32_1 = arith.constant 0 : i32
    return %c0_i32, %c0_i32_0 : i32, i32
  }
  func.func @transform_6(%arg0: i32) -> (i32, i32) {
    %c0_i32 = arith.constant 0 : i32
    %c0_i32_0 = arith.constant 0 : i32
    %c0_i32_1 = arith.constant 0 : i32
    return %c0_i32, %c0_i32_0 : i32, i32
  }
  func.func @transform_7(%arg0: i32) -> (i32, i32) {
    %c0_i32 = arith.constant 0 : i32
    %c0_i32_0 = arith.constant 0 : i32
    %c0_i32_1 = arith.constant 0 : i32
    return %c0_i32, %c0_i32_0 : i32, i32
  }
  func.func @transform_8(%arg0: i32) -> (i32, i32) {
    %c0_i32 = arith.constant 0 : i32
    %c0_i32_0 = arith.constant 0 : i32
    %c0_i32_1 = arith.constant 0 : i32
    return %c0_i32, %c0_i32_0 : i32, i32
  }
  func.func @transform_9(%arg0: i32) -> (i32, i32) {
    %c0_i32 = arith.constant 0 : i32
    %c0_i32_0 = arith.constant 0 : i32
    %c0_i32_1 = arith.constant 0 : i32
    return %c0_i32, %c0_i32_0 : i32, i32
  }
  func.func @transform_10(%arg0: i32) -> (i32, i32) {
    %c0_i32 = arith.constant 0 : i32
    %c0_i32_0 = arith.constant 0 : i32
    %c0_i32_1 = arith.constant 0 : i32
    return %c0_i32, %c0_i32_0 : i32, i32
  }
  func.func @transform_11(%arg0: i32) -> (i32, i32) {
    %c0_i32 = arith.constant 0 : i32
    %c0_i32_0 = arith.constant 0 : i32
    %c0_i32_1 = arith.constant 0 : i32
    return %c0_i32, %c0_i32_0 : i32, i32
  }
  func.func @transform_12(%arg0: i32) -> (i32, i32) {
    %c0_i32 = arith.constant 0 : i32
    %c0_i32_0 = arith.constant 0 : i32
    %c0_i32_1 = arith.constant 0 : i32
    return %c0_i32, %c0_i32_0 : i32, i32
  }
  func.func @transform_13(%arg0: i32) -> (i32, i32) {
    %c0_i32 = arith.constant 0 : i32
    %c0_i32_0 = arith.constant 0 : i32
    return %arg0, %c0_i32 : i32, i32
  }
}

module attributes {stable_mosaic.version = 11 : i64} {
  func.func @mlp_kernel(%arg0: i32, %arg1: memref<8x128xbf16, #tpu.memory_space<vmem>>, %arg2: memref<128x128xbf16, #tpu.memory_space<vmem>>, %arg3: memref<1x128xf32, #tpu.memory_space<vmem>>, %arg4: memref<128x128xbf16, #tpu.memory_space<vmem>>, %arg5: memref<1x128xf32, #tpu.memory_space<vmem>>, %arg6: memref<1x128xf32, #tpu.memory_space<vmem>>, %arg7: memref<1x128xf32, #tpu.memory_space<vmem>>, %arg8: memref<128x128xbf16, #tpu.memory_space<vmem>>, %arg9: memref<1x128xf32, #tpu.memory_space<vmem>>, %arg10: memref<1x128xf32, #tpu.memory_space<vmem>>, %arg11: memref<1x128xf32, #tpu.memory_space<vmem>>, %arg12: memref<128x128xbf16, #tpu.memory_space<vmem>>, %arg13: memref<1x128xf32, #tpu.memory_space<vmem>>, %arg14: memref<8x128xf32, #tpu.memory_space<vmem>>) attributes {dimension_semantics = [#tpu.dimension_semantics<parallel>], iteration_bounds = array<i64: 1>, scalar_prefetch = 0 : i64, scratch_operands = 0 : i64, tpu.core_type = #tpu.core_type<tc>, window_params = [{transform_indices = @transform_0, window_bounds = array<i64: 8, 128>}, {pipeline_mode = #tpu.pipeline_mode<synchronous>, transform_indices = @transform_1, window_bounds = array<i64: 128, 128>}, {pipeline_mode = #tpu.pipeline_mode<synchronous>, transform_indices = @transform_2, window_bounds = array<i64: 1, 128>}, {pipeline_mode = #tpu.pipeline_mode<synchronous>, transform_indices = @transform_3, window_bounds = array<i64: 128, 128>}, {pipeline_mode = #tpu.pipeline_mode<synchronous>, transform_indices = @transform_4, window_bounds = array<i64: 1, 128>}, {pipeline_mode = #tpu.pipeline_mode<synchronous>, transform_indices = @transform_5, window_bounds = array<i64: 1, 128>}, {pipeline_mode = #tpu.pipeline_mode<synchronous>, transform_indices = @transform_6, window_bounds = array<i64: 1, 128>}, {pipeline_mode = #tpu.pipeline_mode<synchronous>, transform_indices = @transform_7, window_bounds = array<i64: 128, 128>}, {pipeline_mode = #tpu.pipeline_mode<synchronous>, transform_indices = @transform_8, window_bounds = array<i64: 1, 128>}, {pipeline_mode = #tpu.pipeline_mode<synchronous>, transform_indices = @transform_9, window_bounds = array<i64: 1, 128>}, {pipeline_mode = #tpu.pipeline_mode<synchronous>, transform_indices = @transform_10, window_bounds = array<i64: 1, 128>}, {pipeline_mode = #tpu.pipeline_mode<synchronous>, transform_indices = @transform_11, window_bounds = array<i64: 128, 128>}, {pipeline_mode = #tpu.pipeline_mode<synchronous>, transform_indices = @transform_12, window_bounds = array<i64: 1, 128>}, {transform_indices = @transform_13, window_bounds = array<i64: 8, 128>}]} {
    %c0 = arith.constant 0 : index
    %c0_0 = arith.constant 0 : index
    %0 = vector.load %arg1[%c0, %c0_0] : memref<8x128xbf16, #tpu.memory_space<vmem>>, vector<8x128xbf16>
    %c0_1 = arith.constant 0 : index
    %c0_2 = arith.constant 0 : index
    %1 = vector.load %arg2[%c0_1, %c0_2] : memref<128x128xbf16, #tpu.memory_space<vmem>>, vector<128x128xbf16>
    %cst = arith.constant dense<0.000000e+00> : vector<8x128xf32>
    %2 = tpu.matmul %0, %1, %cst {dimension_numbers = #tpu.dot_dimension_numbers<[1], [0], [0], [1], [0, 0, 1, 1], [], []>} : vector<8x128xbf16>, vector<128x128xbf16>, vector<8x128xf32> -> vector<8x128xf32>
    %c0_3 = arith.constant 0 : index
    %c0_4 = arith.constant 0 : index
    %3 = vector.load %arg3[%c0_3, %c0_4] : memref<1x128xf32, #tpu.memory_space<vmem>>, vector<1x128xf32>
    %4 = vector.broadcast %3 : vector<1x128xf32> to vector<8x128xf32>
    %5 = arith.addf %2, %4 : vector<8x128xf32>
    %cst_5 = arith.constant 0.000000e+00 : f32
    %6 = vector.broadcast %cst_5 : f32 to vector<8x128xf32>
    %7 = arith.maximumf %5, %6 : vector<8x128xf32>
    %8 = arith.truncf %7 : vector<8x128xf32> to vector<8x128xbf16>
    %c0_6 = arith.constant 0 : index
    %c0_7 = arith.constant 0 : index
    %9 = vector.load %arg4[%c0_6, %c0_7] : memref<128x128xbf16, #tpu.memory_space<vmem>>, vector<128x128xbf16>
    %cst_8 = arith.constant dense<0.000000e+00> : vector<8x128xf32>
    %10 = tpu.matmul %8, %9, %cst_8 {dimension_numbers = #tpu.dot_dimension_numbers<[1], [0], [0], [1], [0, 0, 1, 1], [], []>} : vector<8x128xbf16>, vector<128x128xbf16>, vector<8x128xf32> -> vector<8x128xf32>
    %c0_9 = arith.constant 0 : index
    %c0_10 = arith.constant 0 : index
    %11 = vector.load %arg5[%c0_9, %c0_10] : memref<1x128xf32, #tpu.memory_space<vmem>>, vector<1x128xf32>
    %12 = vector.broadcast %11 : vector<1x128xf32> to vector<8x128xf32>
    %13 = arith.addf %10, %12 : vector<8x128xf32>
    %cst_11 = arith.constant dense<0.000000e+00> : vector<8xf32>
    %14 = vector.multi_reduction <add>, %13, %cst_11 [1] : vector<8x128xf32> to vector<8xf32>
    %15 = vector.shape_cast %14 : vector<8xf32> to vector<8x1xf32>
    %16 = arith.mulf %13, %13 : vector<8x128xf32>
    %cst_12 = arith.constant dense<0.000000e+00> : vector<8xf32>
    %17 = vector.multi_reduction <add>, %16, %cst_12 [1] : vector<8x128xf32> to vector<8xf32>
    %18 = vector.shape_cast %17 : vector<8xf32> to vector<8x1xf32>
    %cst_13 = arith.constant 3.125000e-02 : f32
    %19 = vector.broadcast %cst_13 : f32 to vector<8x1xf32>
    %20 = arith.mulf %15, %19 : vector<8x1xf32>
    %cst_14 = arith.constant 3.125000e-02 : f32
    %21 = vector.broadcast %cst_14 : f32 to vector<8x1xf32>
    %22 = arith.mulf %18, %21 : vector<8x1xf32>
    %23 = arith.mulf %20, %20 : vector<8x1xf32>
    %24 = arith.subf %22, %23 : vector<8x1xf32>
    %cst_15 = arith.constant 0.000000e+00 : f32
    %25 = vector.broadcast %cst_15 : f32 to vector<8x1xf32>
    %26 = arith.maximumf %24, %25 : vector<8x1xf32>
    %27 = vector.broadcast %20 : vector<8x1xf32> to vector<8x128xf32>
    %28 = arith.subf %13, %27 : vector<8x128xf32>
    %cst_16 = arith.constant 9.99999974E-6 : f32
    %29 = vector.broadcast %cst_16 : f32 to vector<8x1xf32>
    %30 = arith.addf %26, %29 : vector<8x1xf32>
    %31 = math.rsqrt %30 : vector<8x1xf32>
    %32 = vector.broadcast %31 : vector<8x1xf32> to vector<8x128xf32>
    %33 = arith.mulf %28, %32 : vector<8x128xf32>
    %c0_17 = arith.constant 0 : index
    %c0_18 = arith.constant 0 : index
    %34 = vector.load %arg6[%c0_17, %c0_18] : memref<1x128xf32, #tpu.memory_space<vmem>>, vector<1x128xf32>
    %35 = vector.broadcast %34 : vector<1x128xf32> to vector<8x128xf32>
    %36 = arith.mulf %33, %35 : vector<8x128xf32>
    %c0_19 = arith.constant 0 : index
    %c0_20 = arith.constant 0 : index
    %37 = vector.load %arg7[%c0_19, %c0_20] : memref<1x128xf32, #tpu.memory_space<vmem>>, vector<1x128xf32>
    %38 = vector.broadcast %37 : vector<1x128xf32> to vector<8x128xf32>
    %39 = arith.addf %36, %38 : vector<8x128xf32>
    %cst_21 = arith.constant 0.000000e+00 : f32
    %40 = vector.broadcast %cst_21 : f32 to vector<8x128xf32>
    %41 = arith.maximumf %39, %40 : vector<8x128xf32>
    %42 = arith.truncf %41 : vector<8x128xf32> to vector<8x128xbf16>
    %c0_22 = arith.constant 0 : index
    %c0_23 = arith.constant 0 : index
    %43 = vector.load %arg8[%c0_22, %c0_23] : memref<128x128xbf16, #tpu.memory_space<vmem>>, vector<128x128xbf16>
    %cst_24 = arith.constant dense<0.000000e+00> : vector<8x128xf32>
    %44 = tpu.matmul %42, %43, %cst_24 {dimension_numbers = #tpu.dot_dimension_numbers<[1], [0], [0], [1], [0, 0, 1, 1], [], []>} : vector<8x128xbf16>, vector<128x128xbf16>, vector<8x128xf32> -> vector<8x128xf32>
    %c0_25 = arith.constant 0 : index
    %c0_26 = arith.constant 0 : index
    %45 = vector.load %arg9[%c0_25, %c0_26] : memref<1x128xf32, #tpu.memory_space<vmem>>, vector<1x128xf32>
    %46 = vector.broadcast %45 : vector<1x128xf32> to vector<8x128xf32>
    %47 = arith.addf %44, %46 : vector<8x128xf32>
    %cst_27 = arith.constant dense<0.000000e+00> : vector<8xf32>
    %48 = vector.multi_reduction <add>, %47, %cst_27 [1] : vector<8x128xf32> to vector<8xf32>
    %49 = vector.shape_cast %48 : vector<8xf32> to vector<8x1xf32>
    %50 = arith.mulf %47, %47 : vector<8x128xf32>
    %cst_28 = arith.constant dense<0.000000e+00> : vector<8xf32>
    %51 = vector.multi_reduction <add>, %50, %cst_28 [1] : vector<8x128xf32> to vector<8xf32>
    %52 = vector.shape_cast %51 : vector<8xf32> to vector<8x1xf32>
    %cst_29 = arith.constant 3.125000e-02 : f32
    %53 = vector.broadcast %cst_29 : f32 to vector<8x1xf32>
    %54 = arith.mulf %49, %53 : vector<8x1xf32>
    %cst_30 = arith.constant 3.125000e-02 : f32
    %55 = vector.broadcast %cst_30 : f32 to vector<8x1xf32>
    %56 = arith.mulf %52, %55 : vector<8x1xf32>
    %57 = arith.mulf %54, %54 : vector<8x1xf32>
    %58 = arith.subf %56, %57 : vector<8x1xf32>
    %cst_31 = arith.constant 0.000000e+00 : f32
    %59 = vector.broadcast %cst_31 : f32 to vector<8x1xf32>
    %60 = arith.maximumf %58, %59 : vector<8x1xf32>
    %61 = vector.broadcast %54 : vector<8x1xf32> to vector<8x128xf32>
    %62 = arith.subf %47, %61 : vector<8x128xf32>
    %cst_32 = arith.constant 9.99999974E-6 : f32
    %63 = vector.broadcast %cst_32 : f32 to vector<8x1xf32>
    %64 = arith.addf %60, %63 : vector<8x1xf32>
    %65 = math.rsqrt %64 : vector<8x1xf32>
    %66 = vector.broadcast %65 : vector<8x1xf32> to vector<8x128xf32>
    %67 = arith.mulf %62, %66 : vector<8x128xf32>
    %c0_33 = arith.constant 0 : index
    %c0_34 = arith.constant 0 : index
    %68 = vector.load %arg10[%c0_33, %c0_34] : memref<1x128xf32, #tpu.memory_space<vmem>>, vector<1x128xf32>
    %69 = vector.broadcast %68 : vector<1x128xf32> to vector<8x128xf32>
    %70 = arith.mulf %67, %69 : vector<8x128xf32>
    %c0_35 = arith.constant 0 : index
    %c0_36 = arith.constant 0 : index
    %71 = vector.load %arg11[%c0_35, %c0_36] : memref<1x128xf32, #tpu.memory_space<vmem>>, vector<1x128xf32>
    %72 = vector.broadcast %71 : vector<1x128xf32> to vector<8x128xf32>
    %73 = arith.addf %70, %72 : vector<8x128xf32>
    %cst_37 = arith.constant 0.000000e+00 : f32
    %74 = vector.broadcast %cst_37 : f32 to vector<8x128xf32>
    %75 = arith.maximumf %73, %74 : vector<8x128xf32>
    %76 = arith.truncf %75 : vector<8x128xf32> to vector<8x128xbf16>
    %c0_38 = arith.constant 0 : index
    %c0_39 = arith.constant 0 : index
    %77 = vector.load %arg12[%c0_38, %c0_39] : memref<128x128xbf16, #tpu.memory_space<vmem>>, vector<128x128xbf16>
    %cst_40 = arith.constant dense<0.000000e+00> : vector<8x128xf32>
    %78 = tpu.matmul %76, %77, %cst_40 {dimension_numbers = #tpu.dot_dimension_numbers<[1], [0], [0], [1], [0, 0, 1, 1], [], []>} : vector<8x128xbf16>, vector<128x128xbf16>, vector<8x128xf32> -> vector<8x128xf32>
    %c0_41 = arith.constant 0 : index
    %c0_42 = arith.constant 0 : index
    %79 = vector.load %arg13[%c0_41, %c0_42] : memref<1x128xf32, #tpu.memory_space<vmem>>, vector<1x128xf32>
    %80 = vector.broadcast %79 : vector<1x128xf32> to vector<8x128xf32>
    %81 = arith.addf %78, %80 : vector<8x128xf32>
    %c0_43 = arith.constant 0 : index
    %c0_44 = arith.constant 0 : index
    %82 = vector.load %arg14[%c0_43, %c0_44] : memref<8x128xf32, #tpu.memory_space<vmem>>, vector<8x128xf32>
    tpu.vector_store %arg14[%c0_43, %c0_44], %81 {strides = array<i32>} : memref<8x128xf32, #tpu.memory_space<vmem>>, vector<8x128xf32>,
    return
  }
  func.func @transform_0(%arg0: i32) -> (i32, i32) {
    %c0_i32 = arith.constant 0 : i32
    %c0_i32_0 = arith.constant 0 : i32
    return %arg0, %c0_i32 : i32, i32
  }
  func.func @transform_1(%arg0: i32) -> (i32, i32) {
    %c0_i32 = arith.constant 0 : i32
    %c0_i32_0 = arith.constant 0 : i32
    %c0_i32_1 = arith.constant 0 : i32
    return %c0_i32, %c0_i32_0 : i32, i32
  }
  func.func @transform_2(%arg0: i32) -> (i32, i32) {
    %c0_i32 = arith.constant 0 : i32
    %c0_i32_0 = arith.constant 0 : i32
    %c0_i32_1 = arith.constant 0 : i32
    return %c0_i32, %c0_i32_0 : i32, i32
  }
  func.func @transform_3(%arg0: i32) -> (i32, i32) {
    %c0_i32 = arith.constant 0 : i32
    %c0_i32_0 = arith.constant 0 : i32
    %c0_i32_1 = arith.constant 0 : i32
    return %c0_i32, %c0_i32_0 : i32, i32
  }
  func.func @transform_4(%arg0: i32) -> (i32, i32) {
    %c0_i32 = arith.constant 0 : i32
    %c0_i32_0 = arith.constant 0 : i32
    %c0_i32_1 = arith.constant 0 : i32
    return %c0_i32, %c0_i32_0 : i32, i32
  }
  func.func @transform_5(%arg0: i32) -> (i32, i32) {
    %c0_i32 = arith.constant 0 : i32
    %c0_i32_0 = arith.constant 0 : i32
    %c0_i32_1 = arith.constant 0 : i32
    return %c0_i32, %c0_i32_0 : i32, i32
  }
  func.func @transform_6(%arg0: i32) -> (i32, i32) {
    %c0_i32 = arith.constant 0 : i32
    %c0_i32_0 = arith.constant 0 : i32
    %c0_i32_1 = arith.constant 0 : i32
    return %c0_i32, %c0_i32_0 : i32, i32
  }
  func.func @transform_7(%arg0: i32) -> (i32, i32) {
    %c0_i32 = arith.constant 0 : i32
    %c0_i32_0 = arith.constant 0 : i32
    %c0_i32_1 = arith.constant 0 : i32
    return %c0_i32, %c0_i32_0 : i32, i32
  }
  func.func @transform_8(%arg0: i32) -> (i32, i32) {
    %c0_i32 = arith.constant 0 : i32
    %c0_i32_0 = arith.constant 0 : i32
    %c0_i32_1 = arith.constant 0 : i32
    return %c0_i32, %c0_i32_0 : i32, i32
  }
  func.func @transform_9(%arg0: i32) -> (i32, i32) {
    %c0_i32 = arith.constant 0 : i32
    %c0_i32_0 = arith.constant 0 : i32
    %c0_i32_1 = arith.constant 0 : i32
    return %c0_i32, %c0_i32_0 : i32, i32
  }
  func.func @transform_10(%arg0: i32) -> (i32, i32) {
    %c0_i32 = arith.constant 0 : i32
    %c0_i32_0 = arith.constant 0 : i32
    %c0_i32_1 = arith.constant 0 : i32
    return %c0_i32, %c0_i32_0 : i32, i32
  }
  func.func @transform_11(%arg0: i32) -> (i32, i32) {
    %c0_i32 = arith.constant 0 : i32
    %c0_i32_0 = arith.constant 0 : i32
    %c0_i32_1 = arith.constant 0 : i32
    return %c0_i32, %c0_i32_0 : i32, i32
  }
  func.func @transform_12(%arg0: i32) -> (i32, i32) {
    %c0_i32 = arith.constant 0 : i32
    %c0_i32_0 = arith.constant 0 : i32
    %c0_i32_1 = arith.constant 0 : i32
    return %c0_i32, %c0_i32_0 : i32, i32
  }
  func.func @transform_13(%arg0: i32) -> (i32, i32) {
    %c0_i32 = arith.constant 0 : i32
    %c0_i32_0 = arith.constant 0 : i32
    return %arg0, %c0_i32 : i32, i32
  }
}

</mosaic_0001>

<llo_original>
// kernel: fwd.1
$region0: #{fwd.1}
  #allocation0 [shape = 'u32[]', space=smem, size = 0x4, offset = 0x4, fixed_abs, tag = 'smem constant byte address 0x4 - core index']
  #allocation1 [shape = 'u32[72,128]{1,0:T(1,128)}', space=vmem, size = 0x9000, scoped, tag = 'internal scratch']
  %s0 = inlined_call_operand.vmem [shape: bf16[8,128], index: 0, kind: input, shape index: {}]
  %s1 = inlined_call_operand.hbm [shape: bf16[128,128], index: 1, kind: input, shape index: {}]
  %s2 = inlined_call_operand.vmem [shape: f32[1,128], index: 2, kind: input, shape index: {}]
  %s3 = inlined_call_operand.hbm [shape: bf16[128,128], index: 3, kind: input, shape index: {}]
  %s4 = inlined_call_operand.vmem [shape: f32[1,128], index: 4, kind: input, shape index: {}]
  %s5 = inlined_call_operand.vmem [shape: f32[1,128], index: 5, kind: input, shape index: {}]
  %s6 = inlined_call_operand.vmem [shape: f32[1,128], index: 6, kind: input, shape index: {}]
  %s7 = inlined_call_operand.hbm [shape: bf16[128,128], index: 7, kind: input, shape index: {}]
  %s8 = inlined_call_operand.vmem [shape: f32[1,128], index: 8, kind: input, shape index: {}]
  %s9 = inlined_call_operand.vmem [shape: f32[1,128], index: 9, kind: input, shape index: {}]
  %s10 = inlined_call_operand.vmem [shape: f32[1,128], index: 10, kind: input, shape index: {}]
  %s11 = inlined_call_operand.hbm [shape: bf16[128,128], index: 11, kind: input, shape index: {}]
  %s12 = inlined_call_operand.vmem [shape: f32[1,128], index: 12, kind: input, shape index: {}]
  %s13 = inlined_call_operand.hbm [shape: f32[8,128], index: 13, kind: output, shape index: {}]
  %s14 = sld [smem:[#allocation0]]
  $region78: #{fwd.1} parent=0
    _
  %s16 = ssub.s32 1, %s14
  %s17 = scalar_select 0, %s16, %s14
  $region1: #{fwd.1} parent=0
    #allocation2 [shape = 'u8[32768]{0}', space=vmem, size = 0x8000, scoped, tag = 'input window, operand 1, single buffered']
    #allocation3 [shape = 's32[1]{0}', space=sflag, size = 0x4, scoped, tag = 'scoped memory for fwd.1']
    #allocation4 [shape = 's32[1]{0}', space=sflag, size = 0x4, scoped, tag = 'scoped memory for fwd.1']
    #allocation5 [shape = 'u8[32768]{0}', space=vmem, size = 0x8000, scoped, tag = 'input window, operand 3, single buffered']
    #allocation6 [shape = 's32[1]{0}', space=sflag, size = 0x4, scoped, tag = 'scoped memory for fwd.1']
    #allocation7 [shape = 'u8[32768]{0}', space=vmem, size = 0x8000, scoped, tag = 'input window, operand 7, single buffered']
    #allocation8 [shape = 'u8[32768]{0}', space=vmem, size = 0x8000, scoped, tag = 'input window, operand 11, single buffered']
    #allocation9 [shape = 's32[1]{0}', space=sflag, size = 0x4, scoped, tag = 'scoped memory for fwd.1']
    #allocation10 [shape = 'u8[4096]{0}', space=vmem, size = 0x1000, scoped, tag = 'output window, operand 0, single buffered']
    %18 = vsyncpa [#allocation3], 0
    %19 = vsyncpa [#allocation6], 0
    %20 = vsyncpa [#allocation9], 0
    %21 = vsyncpa [#allocation4], 0
    // Predicated region
    $region2: #{fwd.1} parent=1 // pred_check
      _
    $region3: #{fwd.1} parent=1 // pred_check_branch
      %23 = sbr.rel (0) target = $region5
    $region4: #{fwd.1} parent=1 // pred_region
      _
    $region5: #{fwd.1} parent=1 // pred_fallthru
      _
    // Predicated region
    $region6: #{fwd.1} parent=1 // pred_check
      _
    $region7: #{fwd.1} parent=1 // pred_check_branch
      %25 = sbr.rel (0) target = $region9
    $region8: #{fwd.1} parent=1 // pred_region
      %27 = vsyncadd [#allocation3], 0
      %s28 = sshll.u32 %s1, 4
      %s29 = int_to_ptr.hbm [resolvable:$true] %s28
      %s30 = sshll.u32 [#allocation2], 4
      %s31 = int_to_ptr.vmem [resolvable:$true] %s30
      %36 = dma.hbm_to_vmem [thread:$0]  %s29, 1024, %s31, [#allocation3], 64, 64, 4
    $region9: #{fwd.1} parent=1 // pred_fallthru
      _
    // Predicated region
    $region10: #{fwd.1} parent=1 // pred_check
      _
    $region11: #{fwd.1} parent=1 // pred_check_branch
      %38 = sbr.rel (0) target = $region13
    $region12: #{fwd.1} parent=1 // pred_region
      _
    $region13: #{fwd.1} parent=1 // pred_fallthru
      _
    // Predicated region
    $region14: #{fwd.1} parent=1 // pred_check
      _
    $region15: #{fwd.1} parent=1 // pred_check_branch
      %40 = sbr.rel (0) target = $region17
    $region16: #{fwd.1} parent=1 // pred_region
      %42 = vsyncadd [#allocation6], 0
      %s43 = sshll.u32 %s3, 4
      %s44 = int_to_ptr.hbm [resolvable:$true] %s43
      %s45 = sshll.u32 [#allocation5], 4
      %s46 = int_to_ptr.vmem [resolvable:$true] %s45
      %51 = dma.hbm_to_vmem [thread:$0]  %s44, 1024, %s46, [#allocation6], 64, 64, 4
    $region17: #{fwd.1} parent=1 // pred_fallthru
      _
    // Predicated region
    $region18: #{fwd.1} parent=1 // pred_check
      _
    $region19: #{fwd.1} parent=1 // pred_check_branch
      %53 = sbr.rel (0) target = $region21
    $region20: #{fwd.1} parent=1 // pred_region
      _
    $region21: #{fwd.1} parent=1 // pred_fallthru
      _
    // Predicated region
    $region22: #{fwd.1} parent=1 // pred_check
      _
    $region23: #{fwd.1} parent=1 // pred_check_branch
      %55 = sbr.rel (0) target = $region25
    $region24: #{fwd.1} parent=1 // pred_region
      _
    $region25: #{fwd.1} parent=1 // pred_fallthru
      _
    // Predicated region
    $region26: #{fwd.1} parent=1 // pred_check
      _
    $region27: #{fwd.1} parent=1 // pred_check_branch
      %57 = sbr.rel (0) target = $region29
    $region28: #{fwd.1} parent=1 // pred_region
      _
    $region29: #{fwd.1} parent=1 // pred_fallthru
      _
    // Predicated region
    $region30: #{fwd.1} parent=1 // pred_check
      _
    $region31: #{fwd.1} parent=1 // pred_check_branch
      %59 = sbr.rel (0) target = $region33
    $region32: #{fwd.1} parent=1 // pred_region
      %61 = vsyncadd [#allocation6], 0
      %s62 = sshll.u32 %s7, 4
      %s63 = int_to_ptr.hbm [resolvable:$true] %s62
      %s64 = sshll.u32 [#allocation7], 4
      %s65 = int_to_ptr.vmem [resolvable:$true] %s64
      %70 = dma.hbm_to_vmem [thread:$0]  %s63, 1024, %s65, [#allocation6], 64, 64, 4
    $region33: #{fwd.1} parent=1 // pred_fallthru
      _
    // Predicated region
    $region34: #{fwd.1} parent=1 // pred_check
      _
    $region35: #{fwd.1} parent=1 // pred_check_branch
      %72 = sbr.rel (0) target = $region37
    $region36: #{fwd.1} parent=1 // pred_region
      _
    $region37: #{fwd.1} parent=1 // pred_fallthru
      _
    // Predicated region
    $region38: #{fwd.1} parent=1 // pred_check
      _
    $region39: #{fwd.1} parent=1 // pred_check_branch
      %74 = sbr.rel (0) target = $region41
    $region40: #{fwd.1} parent=1 // pred_region
      _
    $region41: #{fwd.1} parent=1 // pred_fallthru
      _
    // Predicated region
    $region42: #{fwd.1} parent=1 // pred_check
      _
    $region43: #{fwd.1} parent=1 // pred_check_branch
      %76 = sbr.rel (0) target = $region45
    $region44: #{fwd.1} parent=1 // pred_region
      _
    $region45: #{fwd.1} parent=1 // pred_fallthru
      _
    // Predicated region
    $region46: #{fwd.1} parent=1 // pred_check
      _
    $region47: #{fwd.1} parent=1 // pred_check_branch
      %78 = sbr.rel (0) target = $region49
    $region48: #{fwd.1} parent=1 // pred_region
      %80 = vsyncadd [#allocation9], 0
      %s81 = sshll.u32 %s11, 4
      %s82 = int_to_ptr.hbm [resolvable:$true] %s81
      %s83 = sshll.u32 [#allocation8], 4
      %s84 = int_to_ptr.vmem [resolvable:$true] %s83
      %89 = dma.hbm_to_vmem [thread:$0]  %s82, 1024, %s84, [#allocation9], 64, 64, 4
    $region49: #{fwd.1} parent=1 // pred_fallthru
      _
    // Predicated region
    $region50: #{fwd.1} parent=1 // pred_check
      _
    $region51: #{fwd.1} parent=1 // pred_check_branch
      %91 = sbr.rel (0) target = $region53
    $region52: #{fwd.1} parent=1 // pred_region
      _
    $region53: #{fwd.1} parent=1 // pred_fallthru
      _
    // Predicated region
    $region54: #{fwd.1} parent=1 // pred_check
      _
    $region55: #{fwd.1} parent=1 // pred_check_branch
      %93 = sbr.rel (0) target = $region57
    $region56: #{fwd.1} parent=1 // pred_region
      %95 = dma.done [#allocation3], 1024
    $region57: #{fwd.1} parent=1 // pred_fallthru
      _
    // Predicated region
    $region58: #{fwd.1} parent=1 // pred_check
      _
    $region59: #{fwd.1} parent=1 // pred_check_branch
      %97 = sbr.rel (0) target = $region61
    $region60: #{fwd.1} parent=1 // pred_region
      %99 = dma.done [#allocation6], 1024
    $region61: #{fwd.1} parent=1 // pred_fallthru
      _
    // Predicated region
    $region62: #{fwd.1} parent=1 // pred_check
      _
    $region63: #{fwd.1} parent=1 // pred_check_branch
      %101 = sbr.rel (0) target = $region65
    $region64: #{fwd.1} parent=1 // pred_region
      %103 = dma.done [#allocation6], 1024
    $region65: #{fwd.1} parent=1 // pred_fallthru
      _
    // Predicated region
    $region66: #{fwd.1} parent=1 // pred_check
      _
    $region67: #{fwd.1} parent=1 // pred_check_branch
      %105 = sbr.rel (0) target = $region69
    $region68: #{fwd.1} parent=1 // pred_region
      %107 = dma.done [#allocation9], 1024
    $region69: #{fwd.1} parent=1 // pred_fallthru
      _
    %v108 = vld [vmem:[%s0] sm:$0xf]
    %v109 = vld [vmem:[#allocation2] sm:$0xf]
    %v110 = vld [vmem:[#allocation2 + $0x4] sm:$0xf]
    %v111 = vld [vmem:[#allocation2 + $0x8] sm:$0xf]
    %v112 = vld [vmem:[#allocation2 + $0xc] sm:$0xf]
    %v113 = vld [vmem:[#allocation2 + $0x10] sm:$0xf]
    %v114 = vld [vmem:[#allocation2 + $0x14] sm:$0xf]
    %v115 = vld [vmem:[#allocation2 + $0x18] sm:$0xf]
    %v116 = vld [vmem:[#allocation2 + $0x1c] sm:$0xf]
    %v117 = vld [vmem:[#allocation2 + $0x20] sm:$0xf]
    %v118 = vld [vmem:[#allocation2 + $0x24] sm:$0xf]
    %v119 = vld [vmem:[#allocation2 + $0x28] sm:$0xf]
    %v120 = vld [vmem:[#allocation2 + $0x2c] sm:$0xf]
    %v121 = vld [vmem:[#allocation2 + $0x30] sm:$0xf]
    %v122 = vld [vmem:[#allocation2 + $0x34] sm:$0xf]
    %v123 = vld [vmem:[#allocation2 + $0x38] sm:$0xf]
    %v124 = vld [vmem:[#allocation2 + $0x3c] sm:$0xf]
    %v125 = vld [vmem:[%s2] sm:$0x1]
    %v127 = vperm.slane %v125, 0
    %v145 = vunpack.c.l.b16 %v109
    %v146 = vunpack.c.l.b16 %v110
    %v147 = vunpack.c.l.b16 %v111
    %v148 = vunpack.c.l.b16 %v112
    %v149 = vunpack.c.l.b16 %v113
    %v150 = vunpack.c.l.b16 %v114
    %v151 = vunpack.c.l.b16 %v115
    %v152 = vunpack.c.l.b16 %v116
    %v153 = vunpack.c.l.b16 %v117
    %v154 = vunpack.c.l.b16 %v118
    %v155 = vunpack.c.l.b16 %v119
    %v156 = vunpack.c.l.b16 %v120
    %v157 = vunpack.c.l.b16 %v121
    %v158 = vunpack.c.l.b16 %v122
    %v159 = vunpack.c.l.b16 %v123
    %v160 = vunpack.c.l.b16 %v124
    %v161 = vpack.c.b16 %v146, %v145
    %v162 = vpack.c.b16 %v148, %v147
    %v163 = vpack.c.b16 %v150, %v149
    %v164 = vpack.c.b16 %v152, %v151
    %v165 = vpack.c.b16 %v154, %v153
    %v166 = vpack.c.b16 %v156, %v155
    %v167 = vpack.c.b16 %v158, %v157
    %v168 = vpack.c.b16 %v160, %v159
    %177 = vmatpush.bf16.msra.mxu0 %v168
    %178 = vmatpush.bf16.msra.mxu0 %v167
    %179 = vmatpush.bf16.msra.mxu0 %v166
    %180 = vmatpush.bf16.msra.mxu0 %v165
    %181 = vmatpush.bf16.msra.mxu0 %v164
    %182 = vmatpush.bf16.msra.mxu0 %v163
    %183 = vmatpush.bf16.msra.mxu0 %v162
    %184 = vmatpush.bf16.msra.mxu0 %v161
    %185 = vmatmul.bf16.gmra.mxu0 %v108
    %v186 = vpop.f32.mrf.mxu0
    %v187 = vadd.f32 %v127, %v186
    %v188 = vpop.f32.mrf.mxu0
    %189 = vdwg.mxu0
    %v190 = vmax.f32 %v187, 0.0
    %v191 = vpack.c.bf16 %v190, %v190
    %v192 = vld [vmem:[#allocation5] sm:$0xf]
    %v193 = vld [vmem:[#allocation5 + $0x4] sm:$0xf]
    %v194 = vld [vmem:[#allocation5 + $0x8] sm:$0xf]
    %v195 = vld [vmem:[#allocation5 + $0xc] sm:$0xf]
    %v196 = vld [vmem:[#allocation5 + $0x10] sm:$0xf]
    %v197 = vld [vmem:[#allocation5 + $0x14] sm:$0xf]
    %v198 = vld [vmem:[#allocation5 + $0x18] sm:$0xf]
    %v199 = vld [vmem:[#allocation5 + $0x1c] sm:$0xf]
    %v200 = vld [vmem:[#allocation5 + $0x20] sm:$0xf]
    %v201 = vld [vmem:[#allocation5 + $0x24] sm:$0xf]
    %v202 = vld [vmem:[#allocation5 + $0x28] sm:$0xf]
    %v203 = vld [vmem:[#allocation5 + $0x2c] sm:$0xf]
    %v204 = vld [vmem:[#allocation5 + $0x30] sm:$0xf]
    %v205 = vld [vmem:[#allocation5 + $0x34] sm:$0xf]
    %v206 = vld [vmem:[#allocation5 + $0x38] sm:$0xf]
    %v207 = vld [vmem:[#allocation5 + $0x3c] sm:$0xf]
    %v208 = vld [vmem:[%s4] sm:$0x1]
    %v210 = vperm.slane %v208, 0
    %v228 = vunpack.c.l.b16 %v192
    %v229 = vunpack.c.l.b16 %v193
    %v230 = vunpack.c.l.b16 %v194
    %v231 = vunpack.c.l.b16 %v195
    %v232 = vunpack.c.l.b16 %v196
    %v233 = vunpack.c.l.b16 %v197
    %v234 = vunpack.c.l.b16 %v198
    %v235 = vunpack.c.l.b16 %v199
    %v236 = vunpack.c.l.b16 %v200
    %v237 = vunpack.c.l.b16 %v201
    %v238 = vunpack.c.l.b16 %v202
    %v239 = vunpack.c.l.b16 %v203
    %v240 = vunpack.c.l.b16 %v204
    %v241 = vunpack.c.l.b16 %v205
    %v242 = vunpack.c.l.b16 %v206
    %v243 = vunpack.c.l.b16 %v207
    %v244 = vpack.c.b16 %v229, %v228
    %v245 = vpack.c.b16 %v231, %v230
    %v246 = vpack.c.b16 %v233, %v232
    %v247 = vpack.c.b16 %v235, %v234
    %v248 = vpack.c.b16 %v237, %v236
    %v249 = vpack.c.b16 %v239, %v238
    %v250 = vpack.c.b16 %v241, %v240
    %v251 = vpack.c.b16 %v243, %v242
    %260 = vmatpush.bf16.msra.mxu0 %v251
    %261 = vmatpush.bf16.msra.mxu0 %v250
    %262 = vmatpush.bf16.msra.mxu0 %v249
    %263 = vmatpush.bf16.msra.mxu0 %v248
    %264 = vmatpush.bf16.msra.mxu0 %v247
    %265 = vmatpush.bf16.msra.mxu0 %v246
    %266 = vmatpush.bf16.msra.mxu0 %v245
    %267 = vmatpush.bf16.msra.mxu0 %v244
    %268 = vmatmul.bf16.gmra.mxu0 %v191
    %v269 = vpop.f32.mrf.mxu0
    %v270 = vadd.f32 %v210, %v269
    %v271 = vpop.f32.mrf.mxu0
    %272 = vdwg.mxu0
    %273 = vadd.xlane.f32.xlu0 %v270
    %v274 = vpop.xlane.xlu0 %273
    %v275 = vmul.f32 %v270, %v270
    %276 = vadd.xlane.f32.xlu0 %v275
    %v277 = vpop.xlane.xlu0 %276
    %v278 = vmul.f32 %v274, 0.03125
    %v279 = vmul.f32 %v277, 0.03125
    %v280 = vmul.f32 %v278, %v278
    %v281 = vsub.f32 %v279, %v280
    %v282 = vmax.f32 %v281, 0.0
    %v283 = vsub.f32 %v270, %v278
    %v284 = vadd.f32 %v282, 1e-05
    %v285 = vrsqrt.pop %v284
    %v286 = vmul.f32 %v285, %v284
    %v287 = vmul.f32 %v286, %v285
    %v288 = vmul.f32 0.5, %v287
    %v289 = vsub.f32 1.5, %v288
    %v290 = vmul.f32 %v285, %v289
    %vm291 = vweird.f32 %v284
    %vm292 = vweird.f32 %v285
    %vm293 = vmor %vm291, %vm292
    %v294 = vsel %vm293, %v285, %v290
    %v295 = vmul.f32 %v283, %v294
    %v296 = vld [vmem:[%s5] sm:$0x1]
    %v298 = vperm.slane %v296, 0
    %v300 = vmul.f32 %v295, %v298
    %v301 = vld [vmem:[%s6] sm:$0x1]
    %v303 = vperm.slane %v301, 0
    %v305 = vadd.f32 %v300, %v303
    %v306 = vmax.f32 %v305, 0.0
    %v307 = vpack.c.bf16 %v306, %v306
    %v308 = vld [vmem:[#allocation7] sm:$0xf]
    %v309 = vld [vmem:[#allocation7 + $0x4] sm:$0xf]
    %v310 = vld [vmem:[#allocation7 + $0x8] sm:$0xf]
    %v311 = vld [vmem:[#allocation7 + $0xc] sm:$0xf]
    %v312 = vld [vmem:[#allocation7 + $0x10] sm:$0xf]
    %v313 = vld [vmem:[#allocation7 + $0x14] sm:$0xf]
    %v314 = vld [vmem:[#allocation7 + $0x18] sm:$0xf]
    %v315 = vld [vmem:[#allocation7 + $0x1c] sm:$0xf]
    %v316 = vld [vmem:[#allocation7 + $0x20] sm:$0xf]
    %v317 = vld [vmem:[#allocation7 + $0x24] sm:$0xf]
    %v318 = vld [vmem:[#allocation7 + $0x28] sm:$0xf]
    %v319 = vld [vmem:[#allocation7 + $0x2c] sm:$0xf]
    %v320 = vld [vmem:[#allocation7 + $0x30] sm:$0xf]
    %v321 = vld [vmem:[#allocation7 + $0x34] sm:$0xf]
    %v322 = vld [vmem:[#allocation7 + $0x38] sm:$0xf]
    %v323 = vld [vmem:[#allocation7 + $0x3c] sm:$0xf]
    %v324 = vld [vmem:[%s8] sm:$0x1]
    %v326 = vperm.slane %v324, 0
    %v344 = vunpack.c.l.b16 %v308
    %v345 = vunpack.c.l.b16 %v309
    %v346 = vunpack.c.l.b16 %v310
    %v347 = vunpack.c.l.b16 %v311
    %v348 = vunpack.c.l.b16 %v312
    %v349 = vunpack.c.l.b16 %v313
    %v350 = vunpack.c.l.b16 %v314
    %v351 = vunpack.c.l.b16 %v315
    %v352 = vunpack.c.l.b16 %v316
    %v353 = vunpack.c.l.b16 %v317
    %v354 = vunpack.c.l.b16 %v318
    %v355 = vunpack.c.l.b16 %v319
    %v356 = vunpack.c.l.b16 %v320
    %v357 = vunpack.c.l.b16 %v321
    %v358 = vunpack.c.l.b16 %v322
    %v359 = vunpack.c.l.b16 %v323
    %v360 = vpack.c.b16 %v345, %v344
    %v361 = vpack.c.b16 %v347, %v346
    %v362 = vpack.c.b16 %v349, %v348
    %v363 = vpack.c.b16 %v351, %v350
    %v364 = vpack.c.b16 %v353, %v352
    %v365 = vpack.c.b16 %v355, %v354
    %v366 = vpack.c.b16 %v357, %v356
    %v367 = vpack.c.b16 %v359, %v358
    %376 = vmatpush.bf16.msra.mxu0 %v367
    %377 = vmatpush.bf16.msra.mxu0 %v366
    %378 = vmatpush.bf16.msra.mxu0 %v365
    %379 = vmatpush.bf16.msra.mxu0 %v364
    %380 = vmatpush.bf16.msra.mxu0 %v363
    %381 = vmatpush.bf16.msra.mxu0 %v362
    %382 = vmatpush.bf16.msra.mxu0 %v361
    %383 = vmatpush.bf16.msra.mxu0 %v360
    %384 = vmatmul.bf16.gmra.mxu0 %v307
    %v385 = vpop.f32.mrf.mxu0
    %v386 = vadd.f32 %v326, %v385
    %v387 = vpop.f32.mrf.mxu0
    %388 = vdwg.mxu0
    %389 = vadd.xlane.f32.xlu0 %v386
    %v390 = vpop.xlane.xlu0 %389
    %v391 = vmul.f32 %v386, %v386
    %392 = vadd.xlane.f32.xlu0 %v391
    %v393 = vpop.xlane.xlu0 %392
    %v394 = vmul.f32 %v390, 0.03125
    %v395 = vmul.f32 %v393, 0.03125
    %v396 = vmul.f32 %v394, %v394
    %v397 = vsub.f32 %v395, %v396
    %v398 = vmax.f32 %v397, 0.0
    %v399 = vsub.f32 %v386, %v394
    %v400 = vadd.f32 %v398, 1e-05
    %v401 = vrsqrt.pop %v400
    %v402 = vmul.f32 %v401, %v400
    %v403 = vmul.f32 %v402, %v401
    %v404 = vmul.f32 0.5, %v403
    %v405 = vsub.f32 1.5, %v404
    %v406 = vmul.f32 %v401, %v405
    %vm407 = vweird.f32 %v400
    %vm408 = vweird.f32 %v401
    %vm409 = vmor %vm407, %vm408
    %v410 = vsel %vm409, %v401, %v406
    %v411 = vmul.f32 %v399, %v410
    %v412 = vld [vmem:[%s9] sm:$0x1]
    %v414 = vperm.slane %v412, 0
    %v416 = vmul.f32 %v411, %v414
    %v417 = vld [vmem:[%s10] sm:$0x1]
    %v419 = vperm.slane %v417, 0
    %v421 = vadd.f32 %v416, %v419
    %v422 = vmax.f32 %v421, 0.0
    %v423 = vpack.c.bf16 %v422, %v422
    %v424 = vld [vmem:[#allocation8] sm:$0xf]
    %v425 = vld [vmem:[#allocation8 + $0x4] sm:$0xf]
    %v426 = vld [vmem:[#allocation8 + $0x8] sm:$0xf]
    %v427 = vld [vmem:[#allocation8 + $0xc] sm:$0xf]
    %v428 = vld [vmem:[#allocation8 + $0x10] sm:$0xf]
    %v429 = vld [vmem:[#allocation8 + $0x14] sm:$0xf]
    %v430 = vld [vmem:[#allocation8 + $0x18] sm:$0xf]
    %v431 = vld [vmem:[#allocation8 + $0x1c] sm:$0xf]
    %v432 = vld [vmem:[#allocation8 + $0x20] sm:$0xf]
    %v433 = vld [vmem:[#allocation8 + $0x24] sm:$0xf]
    %v434 = vld [vmem:[#allocation8 + $0x28] sm:$0xf]
    %v435 = vld [vmem:[#allocation8 + $0x2c] sm:$0xf]
    %v436 = vld [vmem:[#allocation8 + $0x30] sm:$0xf]
    %v437 = vld [vmem:[#allocation8 + $0x34] sm:$0xf]
    %v438 = vld [vmem:[#allocation8 + $0x38] sm:$0xf]
    %v439 = vld [vmem:[#allocation8 + $0x3c] sm:$0xf]
    %v440 = vld [vmem:[%s12] sm:$0x1]
    %v442 = vperm.slane %v440, 0
    %v460 = vunpack.c.l.b16 %v424
    %v461 = vunpack.c.l.b16 %v425
    %v462 = vunpack.c.l.b16 %v426
    %v463 = vunpack.c.l.b16 %v427
    %v464 = vunpack.c.l.b16 %v428
    %v465 = vunpack.c.l.b16 %v429
    %v466 = vunpack.c.l.b16 %v430
    %v467 = vunpack.c.l.b16 %v431
    %v468 = vunpack.c.l.b16 %v432
    %v469 = vunpack.c.l.b16 %v433
    %v470 = vunpack.c.l.b16 %v434
    %v471 = vunpack.c.l.b16 %v435
    %v472 = vunpack.c.l.b16 %v436
    %v473 = vunpack.c.l.b16 %v437
    %v474 = vunpack.c.l.b16 %v438
    %v475 = vunpack.c.l.b16 %v439
    %v476 = vpack.c.b16 %v461, %v460
    %v477 = vpack.c.b16 %v463, %v462
    %v478 = vpack.c.b16 %v465, %v464
    %v479 = vpack.c.b16 %v467, %v466
    %v480 = vpack.c.b16 %v469, %v468
    %v481 = vpack.c.b16 %v471, %v470
    %v482 = vpack.c.b16 %v473, %v472
    %v483 = vpack.c.b16 %v475, %v474
    %492 = vmatpush.bf16.msra.mxu0 %v483
    %493 = vmatpush.bf16.msra.mxu0 %v482
    %494 = vmatpush.bf16.msra.mxu0 %v481
    %495 = vmatpush.bf16.msra.mxu0 %v480
    %496 = vmatpush.bf16.msra.mxu0 %v479
    %497 = vmatpush.bf16.msra.mxu0 %v478
    %498 = vmatpush.bf16.msra.mxu0 %v477
    %499 = vmatpush.bf16.msra.mxu0 %v476
    %500 = vmatmul.bf16.gmra.mxu0 %v423
    %v501 = vpop.f32.mrf.mxu0
    %v502 = vadd.f32 %v442, %v501
    %v503 = vpop.f32.mrf.mxu0
    %504 = vdwg.mxu0
    %505 = vst [vmem:[#allocation10] sm:$0xff] %v502
    // Predicated region
    $region70: #{fwd.1} parent=1 // pred_check
      _
    $region71: #{fwd.1} parent=1 // pred_check_branch
      %507 = sbr.rel (0) target = $region73
    $region72: #{fwd.1} parent=1 // pred_region
      %509 = vsyncadd [#allocation4], 0
      %s511 = sshll.u32 [#allocation10], 4
      %s512 = int_to_ptr.vmem [resolvable:$true] %s511
      %s513 = sshll.u32 %s13, 4
      %s514 = int_to_ptr.hbm [resolvable:$true] %s513
      %516 = dma.vmem_to_hbm [thread:$0]  %s512, 128, %s514, [#allocation4]
    $region73: #{fwd.1} parent=1 // pred_fallthru
      _
    // Predicated region
    $region74: #{fwd.1} parent=1 // pred_check
      _
    $region75: #{fwd.1} parent=1 // pred_check_branch
      %518 = sbr.rel (0) target = $region77
    $region76: #{fwd.1} parent=1 // pred_region
      %520 = dma.done [#allocation4], 128
    $region77: #{fwd.1} parent=1 // pred_fallthru
      _
    %521 = vsyncpa [#allocation3], 1
    %522 = vsyncpa [#allocation6], 1
    %523 = vsyncpa [#allocation9], 1
    %524 = vsyncpa [#allocation4], 1

// kernel: fwd.1
$region0: #{fwd.1}
  #allocation0 [shape = 'u32[]', space=smem, size = 0x4, offset = 0x4, fixed_abs, tag = 'smem constant byte address 0x4 - core index']
  #allocation1 [shape = 'u32[72,128]{1,0:T(1,128)}', space=vmem, size = 0x9000, scoped, tag = 'internal scratch']
  %s0 = inlined_call_operand.vmem [shape: bf16[8,128], index: 0, kind: input, shape index: {}]
  %s1 = inlined_call_operand.hbm [shape: bf16[128,128], index: 1, kind: input, shape index: {}]
  %s2 = inlined_call_operand.vmem [shape: f32[1,128], index: 2, kind: input, shape index: {}]
  %s3 = inlined_call_operand.hbm [shape: bf16[128,128], index: 3, kind: input, shape index: {}]
  %s4 = inlined_call_operand.vmem [shape: f32[1,128], index: 4, kind: input, shape index: {}]
  %s5 = inlined_call_operand.vmem [shape: f32[1,128], index: 5, kind: input, shape index: {}]
  %s6 = inlined_call_operand.vmem [shape: f32[1,128], index: 6, kind: input, shape index: {}]
  %s7 = inlined_call_operand.hbm [shape: bf16[128,128], index: 7, kind: input, shape index: {}]
  %s8 = inlined_call_operand.vmem [shape: f32[1,128], index: 8, kind: input, shape index: {}]
  %s9 = inlined_call_operand.vmem [shape: f32[1,128], index: 9, kind: input, shape index: {}]
  %s10 = inlined_call_operand.vmem [shape: f32[1,128], index: 10, kind: input, shape index: {}]
  %s11 = inlined_call_operand.hbm [shape: bf16[128,128], index: 11, kind: input, shape index: {}]
  %s12 = inlined_call_operand.vmem [shape: f32[1,128], index: 12, kind: input, shape index: {}]
  %s13 = inlined_call_operand.hbm [shape: f32[8,128], index: 13, kind: output, shape index: {}]
  %s14 = sld [smem:[#allocation0]]
  $region78: #{fwd.1} parent=0
    _
  %s16 = ssub.s32 1, %s14
  %s17 = scalar_select 0, %s16, %s14
  $region1: #{fwd.1} parent=0
    #allocation2 [shape = 'u8[32768]{0}', space=vmem, size = 0x8000, scoped, tag = 'input window, operand 1, single buffered']
    #allocation3 [shape = 's32[1]{0}', space=sflag, size = 0x4, scoped, tag = 'scoped memory for fwd.1']
    #allocation4 [shape = 's32[1]{0}', space=sflag, size = 0x4, scoped, tag = 'scoped memory for fwd.1']
    #allocation5 [shape = 'u8[32768]{0}', space=vmem, size = 0x8000, scoped, tag = 'input window, operand 3, single buffered']
    #allocation6 [shape = 's32[1]{0}', space=sflag, size = 0x4, scoped, tag = 'scoped memory for fwd.1']
    #allocation7 [shape = 'u8[32768]{0}', space=vmem, size = 0x8000, scoped, tag = 'input window, operand 7, single buffered']
    #allocation8 [shape = 'u8[32768]{0}', space=vmem, size = 0x8000, scoped, tag = 'input window, operand 11, single buffered']
    #allocation9 [shape = 's32[1]{0}', space=sflag, size = 0x4, scoped, tag = 'scoped memory for fwd.1']
    #allocation10 [shape = 'u8[4096]{0}', space=vmem, size = 0x1000, scoped, tag = 'output window, operand 0, single buffered']
    %18 = vsyncpa [#allocation3], 0
    %19 = vsyncpa [#allocation6], 0
    %20 = vsyncpa [#allocation9], 0
    %21 = vsyncpa [#allocation4], 0
    // Predicated region
    $region2: #{fwd.1} parent=1 // pred_check
      _
    $region3: #{fwd.1} parent=1 // pred_check_branch
      %23 = sbr.rel (0) target = $region5
    $region4: #{fwd.1} parent=1 // pred_region
      _
    $region5: #{fwd.1} parent=1 // pred_fallthru
      _
    // Predicated region
    $region6: #{fwd.1} parent=1 // pred_check
      _
    $region7: #{fwd.1} parent=1 // pred_check_branch
      %25 = sbr.rel (0) target = $region9
    $region8: #{fwd.1} parent=1 // pred_region
      %27 = vsyncadd [#allocation3], 0
      %s28 = sshll.u32 %s1, 4
      %s29 = int_to_ptr.hbm [resolvable:$true] %s28
      %s30 = sshll.u32 [#allocation2], 4
      %s31 = int_to_ptr.vmem [resolvable:$true] %s30
      %36 = dma.hbm_to_vmem [thread:$0]  %s29, 1024, %s31, [#allocation3], 64, 64, 4
    $region9: #{fwd.1} parent=1 // pred_fallthru
      _
    // Predicated region
    $region10: #{fwd.1} parent=1 // pred_check
      _
    $region11: #{fwd.1} parent=1 // pred_check_branch
      %38 = sbr.rel (0) target = $region13
    $region12: #{fwd.1} parent=1 // pred_region
      _
    $region13: #{fwd.1} parent=1 // pred_fallthru
      _
    // Predicated region
    $region14: #{fwd.1} parent=1 // pred_check
      _
    $region15: #{fwd.1} parent=1 // pred_check_branch
      %40 = sbr.rel (0) target = $region17
    $region16: #{fwd.1} parent=1 // pred_region
      %42 = vsyncadd [#allocation6], 0
      %s43 = sshll.u32 %s3, 4
      %s44 = int_to_ptr.hbm [resolvable:$true] %s43
      %s45 = sshll.u32 [#allocation5], 4
      %s46 = int_to_ptr.vmem [resolvable:$true] %s45
      %51 = dma.hbm_to_vmem [thread:$0]  %s44, 1024, %s46, [#allocation6], 64, 64, 4
    $region17: #{fwd.1} parent=1 // pred_fallthru
      _
    // Predicated region
    $region18: #{fwd.1} parent=1 // pred_check
      _
    $region19: #{fwd.1} parent=1 // pred_check_branch
      %53 = sbr.rel (0) target = $region21
    $region20: #{fwd.1} parent=1 // pred_region
      _
    $region21: #{fwd.1} parent=1 // pred_fallthru
      _
    // Predicated region
    $region22: #{fwd.1} parent=1 // pred_check
      _
    $region23: #{fwd.1} parent=1 // pred_check_branch
      %55 = sbr.rel (0) target = $region25
    $region24: #{fwd.1} parent=1 // pred_region
      _
    $region25: #{fwd.1} parent=1 // pred_fallthru
      _
    // Predicated region
    $region26: #{fwd.1} parent=1 // pred_check
      _
    $region27: #{fwd.1} parent=1 // pred_check_branch
      %57 = sbr.rel (0) target = $region29
    $region28: #{fwd.1} parent=1 // pred_region
      _
    $region29: #{fwd.1} parent=1 // pred_fallthru
      _
    // Predicated region
    $region30: #{fwd.1} parent=1 // pred_check
      _
    $region31: #{fwd.1} parent=1 // pred_check_branch
      %59 = sbr.rel (0) target = $region33
    $region32: #{fwd.1} parent=1 // pred_region
      %61 = vsyncadd [#allocation6], 0
      %s62 = sshll.u32 %s7, 4
      %s63 = int_to_ptr.hbm [resolvable:$true] %s62
      %s64 = sshll.u32 [#allocation7], 4
      %s65 = int_to_ptr.vmem [resolvable:$true] %s64
      %70 = dma.hbm_to_vmem [thread:$0]  %s63, 1024, %s65, [#allocation6], 64, 64, 4
    $region33: #{fwd.1} parent=1 // pred_fallthru
      _
    // Predicated region
    $region34: #{fwd.1} parent=1 // pred_check
      _
    $region35: #{fwd.1} parent=1 // pred_check_branch
      %72 = sbr.rel (0) target = $region37
    $region36: #{fwd.1} parent=1 // pred_region
      _
    $region37: #{fwd.1} parent=1 // pred_fallthru
      _
    // Predicated region
    $region38: #{fwd.1} parent=1 // pred_check
      _
    $region39: #{fwd.1} parent=1 // pred_check_branch
      %74 = sbr.rel (0) target = $region41
    $region40: #{fwd.1} parent=1 // pred_region
      _
    $region41: #{fwd.1} parent=1 // pred_fallthru
      _
    // Predicated region
    $region42: #{fwd.1} parent=1 // pred_check
      _
    $region43: #{fwd.1} parent=1 // pred_check_branch
      %76 = sbr.rel (0) target = $region45
    $region44: #{fwd.1} parent=1 // pred_region
      _
    $region45: #{fwd.1} parent=1 // pred_fallthru
      _
    // Predicated region
    $region46: #{fwd.1} parent=1 // pred_check
      _
    $region47: #{fwd.1} parent=1 // pred_check_branch
      %78 = sbr.rel (0) target = $region49
    $region48: #{fwd.1} parent=1 // pred_region
      %80 = vsyncadd [#allocation9], 0
      %s81 = sshll.u32 %s11, 4
      %s82 = int_to_ptr.hbm [resolvable:$true] %s81
      %s83 = sshll.u32 [#allocation8], 4
      %s84 = int_to_ptr.vmem [resolvable:$true] %s83
      %89 = dma.hbm_to_vmem [thread:$0]  %s82, 1024, %s84, [#allocation9], 64, 64, 4
    $region49: #{fwd.1} parent=1 // pred_fallthru
      _
    // Predicated region
    $region50: #{fwd.1} parent=1 // pred_check
      _
    $region51: #{fwd.1} parent=1 // pred_check_branch
      %91 = sbr.rel (0) target = $region53
    $region52: #{fwd.1} parent=1 // pred_region
      _
    $region53: #{fwd.1} parent=1 // pred_fallthru
      _
    // Predicated region
    $region54: #{fwd.1} parent=1 // pred_check
      _
    $region55: #{fwd.1} parent=1 // pred_check_branch
      %93 = sbr.rel (0) target = $region57
    $region56: #{fwd.1} parent=1 // pred_region
      %95 = dma.done [#allocation3], 1024
    $region57: #{fwd.1} parent=1 // pred_fallthru
      _
    // Predicated region
    $region58: #{fwd.1} parent=1 // pred_check
      _
    $region59: #{fwd.1} parent=1 // pred_check_branch
      %97 = sbr.rel (0) target = $region61
    $region60: #{fwd.1} parent=1 // pred_region
      %99 = dma.done [#allocation6], 1024
    $region61: #{fwd.1} parent=1 // pred_fallthru
      _
    // Predicated region
    $region62: #{fwd.1} parent=1 // pred_check
      _
    $region63: #{fwd.1} parent=1 // pred_check_branch
      %101 = sbr.rel (0) target = $region65
    $region64: #{fwd.1} parent=1 // pred_region
      %103 = dma.done [#allocation6], 1024
    $region65: #{fwd.1} parent=1 // pred_fallthru
      _
    // Predicated region
    $region66: #{fwd.1} parent=1 // pred_check
      _
    $region67: #{fwd.1} parent=1 // pred_check_branch
      %105 = sbr.rel (0) target = $region69
    $region68: #{fwd.1} parent=1 // pred_region
      %107 = dma.done [#allocation9], 1024
    $region69: #{fwd.1} parent=1 // pred_fallthru
      _
    %v108 = vld [vmem:[%s0] sm:$0xf]
    %v109 = vld [vmem:[#allocation2] sm:$0xf]
    %v110 = vld [vmem:[#allocation2 + $0x4] sm:$0xf]
    %v111 = vld [vmem:[#allocation2 + $0x8] sm:$0xf]
    %v112 = vld [vmem:[#allocation2 + $0xc] sm:$0xf]
    %v113 = vld [vmem:[#allocation2 + $0x10] sm:$0xf]
    %v114 = vld [vmem:[#allocation2 + $0x14] sm:$0xf]
    %v115 = vld [vmem:[#allocation2 + $0x18] sm:$0xf]
    %v116 = vld [vmem:[#allocation2 + $0x1c] sm:$0xf]
    %v117 = vld [vmem:[#allocation2 + $0x20] sm:$0xf]
    %v118 = vld [vmem:[#allocation2 + $0x24] sm:$0xf]
    %v119 = vld [vmem:[#allocation2 + $0x28] sm:$0xf]
    %v120 = vld [vmem:[#allocation2 + $0x2c] sm:$0xf]
    %v121 = vld [vmem:[#allocation2 + $0x30] sm:$0xf]
    %v122 = vld [vmem:[#allocation2 + $0x34] sm:$0xf]
    %v123 = vld [vmem:[#allocation2 + $0x38] sm:$0xf]
    %v124 = vld [vmem:[#allocation2 + $0x3c] sm:$0xf]
    %v125 = vld [vmem:[%s2] sm:$0x1]
    %v127 = vperm.slane %v125, 0
    %v145 = vunpack.c.l.b16 %v109
    %v146 = vunpack.c.l.b16 %v110
    %v147 = vunpack.c.l.b16 %v111
    %v148 = vunpack.c.l.b16 %v112
    %v149 = vunpack.c.l.b16 %v113
    %v150 = vunpack.c.l.b16 %v114
    %v151 = vunpack.c.l.b16 %v115
    %v152 = vunpack.c.l.b16 %v116
    %v153 = vunpack.c.l.b16 %v117
    %v154 = vunpack.c.l.b16 %v118
    %v155 = vunpack.c.l.b16 %v119
    %v156 = vunpack.c.l.b16 %v120
    %v157 = vunpack.c.l.b16 %v121
    %v158 = vunpack.c.l.b16 %v122
    %v159 = vunpack.c.l.b16 %v123
    %v160 = vunpack.c.l.b16 %v124
    %v161 = vpack.c.b16 %v146, %v145
    %v162 = vpack.c.b16 %v148, %v147
    %v163 = vpack.c.b16 %v150, %v149
    %v164 = vpack.c.b16 %v152, %v151
    %v165 = vpack.c.b16 %v154, %v153
    %v166 = vpack.c.b16 %v156, %v155
    %v167 = vpack.c.b16 %v158, %v157
    %v168 = vpack.c.b16 %v160, %v159
    %177 = vmatpush.bf16.msra.mxu0 %v168
    %178 = vmatpush.bf16.msra.mxu0 %v167
    %179 = vmatpush.bf16.msra.mxu0 %v166
    %180 = vmatpush.bf16.msra.mxu0 %v165
    %181 = vmatpush.bf16.msra.mxu0 %v164
    %182 = vmatpush.bf16.msra.mxu0 %v163
    %183 = vmatpush.bf16.msra.mxu0 %v162
    %184 = vmatpush.bf16.msra.mxu0 %v161
    %185 = vmatmul.bf16.gmra.mxu0 %v108
    %v186 = vpop.f32.mrf.mxu0
    %v187 = vadd.f32 %v127, %v186
    %v188 = vpop.f32.mrf.mxu0
    %189 = vdwg.mxu0
    %v190 = vmax.f32 %v187, 0.0
    %v191 = vpack.c.bf16 %v190, %v190
    %v192 = vld [vmem:[#allocation5] sm:$0xf]
    %v193 = vld [vmem:[#allocation5 + $0x4] sm:$0xf]
    %v194 = vld [vmem:[#allocation5 + $0x8] sm:$0xf]
    %v195 = vld [vmem:[#allocation5 + $0xc] sm:$0xf]
    %v196 = vld [vmem:[#allocation5 + $0x10] sm:$0xf]
    %v197 = vld [vmem:[#allocation5 + $0x14] sm:$0xf]
    %v198 = vld [vmem:[#allocation5 + $0x18] sm:$0xf]
    %v199 = vld [vmem:[#allocation5 + $0x1c] sm:$0xf]
    %v200 = vld [vmem:[#allocation5 + $0x20] sm:$0xf]
    %v201 = vld [vmem:[#allocation5 + $0x24] sm:$0xf]
    %v202 = vld [vmem:[#allocation5 + $0x28] sm:$0xf]
    %v203 = vld [vmem:[#allocation5 + $0x2c] sm:$0xf]
    %v204 = vld [vmem:[#allocation5 + $0x30] sm:$0xf]
    %v205 = vld [vmem:[#allocation5 + $0x34] sm:$0xf]
    %v206 = vld [vmem:[#allocation5 + $0x38] sm:$0xf]
    %v207 = vld [vmem:[#allocation5 + $0x3c] sm:$0xf]
    %v208 = vld [vmem:[%s4] sm:$0x1]
    %v210 = vperm.slane %v208, 0
    %v228 = vunpack.c.l.b16 %v192
    %v229 = vunpack.c.l.b16 %v193
    %v230 = vunpack.c.l.b16 %v194
    %v231 = vunpack.c.l.b16 %v195
    %v232 = vunpack.c.l.b16 %v196
    %v233 = vunpack.c.l.b16 %v197
    %v234 = vunpack.c.l.b16 %v198
    %v235 = vunpack.c.l.b16 %v199
    %v236 = vunpack.c.l.b16 %v200
    %v237 = vunpack.c.l.b16 %v201
    %v238 = vunpack.c.l.b16 %v202
    %v239 = vunpack.c.l.b16 %v203
    %v240 = vunpack.c.l.b16 %v204
    %v241 = vunpack.c.l.b16 %v205
    %v242 = vunpack.c.l.b16 %v206
    %v243 = vunpack.c.l.b16 %v207
    %v244 = vpack.c.b16 %v229, %v228
    %v245 = vpack.c.b16 %v231, %v230
    %v246 = vpack.c.b16 %v233, %v232
    %v247 = vpack.c.b16 %v235, %v234
    %v248 = vpack.c.b16 %v237, %v236
    %v249 = vpack.c.b16 %v239, %v238
    %v250 = vpack.c.b16 %v241, %v240
    %v251 = vpack.c.b16 %v243, %v242
    %260 = vmatpush.bf16.msra.mxu0 %v251
    %261 = vmatpush.bf16.msra.mxu0 %v250
    %262 = vmatpush.bf16.msra.mxu0 %v249
    %263 = vmatpush.bf16.msra.mxu0 %v248
    %264 = vmatpush.bf16.msra.mxu0 %v247
    %265 = vmatpush.bf16.msra.mxu0 %v246
    %266 = vmatpush.bf16.msra.mxu0 %v245
    %267 = vmatpush.bf16.msra.mxu0 %v244
    %268 = vmatmul.bf16.gmra.mxu0 %v191
    %v269 = vpop.f32.mrf.mxu0
    %v270 = vadd.f32 %v210, %v269
    %v271 = vpop.f32.mrf.mxu0
    %272 = vdwg.mxu0
    %273 = vadd.xlane.f32.xlu0 %v270
    %v274 = vpop.xlane.xlu0 %273
    %v275 = vmul.f32 %v270, %v270
    %276 = vadd.xlane.f32.xlu0 %v275
    %v277 = vpop.xlane.xlu0 %276
    %v278 = vmul.f32 %v274, 0.03125
    %v279 = vmul.f32 %v277, 0.03125
    %v280 = vmul.f32 %v278, %v278
    %v281 = vsub.f32 %v279, %v280
    %v282 = vmax.f32 %v281, 0.0
    %v283 = vsub.f32 %v270, %v278
    %v284 = vadd.f32 %v282, 1e-05
    %v285 = vrsqrt.pop %v284
    %v286 = vmul.f32 %v285, %v284
    %v287 = vmul.f32 %v286, %v285
    %v288 = vmul.f32 0.5, %v287
    %v289 = vsub.f32 1.5, %v288
    %v290 = vmul.f32 %v285, %v289
    %vm291 = vweird.f32 %v284
    %vm292 = vweird.f32 %v285
    %vm293 = vmor %vm291, %vm292
    %v294 = vsel %vm293, %v285, %v290
    %v295 = vmul.f32 %v283, %v294
    %v296 = vld [vmem:[%s5] sm:$0x1]
    %v298 = vperm.slane %v296, 0
    %v300 = vmul.f32 %v295, %v298
    %v301 = vld [vmem:[%s6] sm:$0x1]
    %v303 = vperm.slane %v301, 0
    %v305 = vadd.f32 %v300, %v303
    %v306 = vmax.f32 %v305, 0.0
    %v307 = vpack.c.bf16 %v306, %v306
    %v308 = vld [vmem:[#allocation7] sm:$0xf]
    %v309 = vld [vmem:[#allocation7 + $0x4] sm:$0xf]
    %v310 = vld [vmem:[#allocation7 + $0x8] sm:$0xf]
    %v311 = vld [vmem:[#allocation7 + $0xc] sm:$0xf]
    %v312 = vld [vmem:[#allocation7 + $0x10] sm:$0xf]
    %v313 = vld [vmem:[#allocation7 + $0x14] sm:$0xf]
    %v314 = vld [vmem:[#allocation7 + $0x18] sm:$0xf]
    %v315 = vld [vmem:[#allocation7 + $0x1c] sm:$0xf]
    %v316 = vld [vmem:[#allocation7 + $0x20] sm:$0xf]
    %v317 = vld [vmem:[#allocation7 + $0x24] sm:$0xf]
    %v318 = vld [vmem:[#allocation7 + $0x28] sm:$0xf]
    %v319 = vld [vmem:[#allocation7 + $0x2c] sm:$0xf]
    %v320 = vld [vmem:[#allocation7 + $0x30] sm:$0xf]
    %v321 = vld [vmem:[#allocation7 + $0x34] sm:$0xf]
    %v322 = vld [vmem:[#allocation7 + $0x38] sm:$0xf]
    %v323 = vld [vmem:[#allocation7 + $0x3c] sm:$0xf]
    %v324 = vld [vmem:[%s8] sm:$0x1]
    %v326 = vperm.slane %v324, 0
    %v344 = vunpack.c.l.b16 %v308
    %v345 = vunpack.c.l.b16 %v309
    %v346 = vunpack.c.l.b16 %v310
    %v347 = vunpack.c.l.b16 %v311
    %v348 = vunpack.c.l.b16 %v312
    %v349 = vunpack.c.l.b16 %v313
    %v350 = vunpack.c.l.b16 %v314
    %v351 = vunpack.c.l.b16 %v315
    %v352 = vunpack.c.l.b16 %v316
    %v353 = vunpack.c.l.b16 %v317
    %v354 = vunpack.c.l.b16 %v318
    %v355 = vunpack.c.l.b16 %v319
    %v356 = vunpack.c.l.b16 %v320
    %v357 = vunpack.c.l.b16 %v321
    %v358 = vunpack.c.l.b16 %v322
    %v359 = vunpack.c.l.b16 %v323
    %v360 = vpack.c.b16 %v345, %v344
    %v361 = vpack.c.b16 %v347, %v346
    %v362 = vpack.c.b16 %v349, %v348
    %v363 = vpack.c.b16 %v351, %v350
    %v364 = vpack.c.b16 %v353, %v352
    %v365 = vpack.c.b16 %v355, %v354
    %v366 = vpack.c.b16 %v357, %v356
    %v367 = vpack.c.b16 %v359, %v358
    %376 = vmatpush.bf16.msra.mxu0 %v367
    %377 = vmatpush.bf16.msra.mxu0 %v366
    %378 = vmatpush.bf16.msra.mxu0 %v365
    %379 = vmatpush.bf16.msra.mxu0 %v364
    %380 = vmatpush.bf16.msra.mxu0 %v363
    %381 = vmatpush.bf16.msra.mxu0 %v362
    %382 = vmatpush.bf16.msra.mxu0 %v361
    %383 = vmatpush.bf16.msra.mxu0 %v360
    %384 = vmatmul.bf16.gmra.mxu0 %v307
    %v385 = vpop.f32.mrf.mxu0
    %v386 = vadd.f32 %v326, %v385
    %v387 = vpop.f32.mrf.mxu0
    %388 = vdwg.mxu0
    %389 = vadd.xlane.f32.xlu0 %v386
    %v390 = vpop.xlane.xlu0 %389
    %v391 = vmul.f32 %v386, %v386
    %392 = vadd.xlane.f32.xlu0 %v391
    %v393 = vpop.xlane.xlu0 %392
    %v394 = vmul.f32 %v390, 0.03125
    %v395 = vmul.f32 %v393, 0.03125
    %v396 = vmul.f32 %v394, %v394
    %v397 = vsub.f32 %v395, %v396
    %v398 = vmax.f32 %v397, 0.0
    %v399 = vsub.f32 %v386, %v394
    %v400 = vadd.f32 %v398, 1e-05
    %v401 = vrsqrt.pop %v400
    %v402 = vmul.f32 %v401, %v400
    %v403 = vmul.f32 %v402, %v401
    %v404 = vmul.f32 0.5, %v403
    %v405 = vsub.f32 1.5, %v404
    %v406 = vmul.f32 %v401, %v405
    %vm407 = vweird.f32 %v400
    %vm408 = vweird.f32 %v401
    %vm409 = vmor %vm407, %vm408
    %v410 = vsel %vm409, %v401, %v406
    %v411 = vmul.f32 %v399, %v410
    %v412 = vld [vmem:[%s9] sm:$0x1]
    %v414 = vperm.slane %v412, 0
    %v416 = vmul.f32 %v411, %v414
    %v417 = vld [vmem:[%s10] sm:$0x1]
    %v419 = vperm.slane %v417, 0
    %v421 = vadd.f32 %v416, %v419
    %v422 = vmax.f32 %v421, 0.0
    %v423 = vpack.c.bf16 %v422, %v422
    %v424 = vld [vmem:[#allocation8] sm:$0xf]
    %v425 = vld [vmem:[#allocation8 + $0x4] sm:$0xf]
    %v426 = vld [vmem:[#allocation8 + $0x8] sm:$0xf]
    %v427 = vld [vmem:[#allocation8 + $0xc] sm:$0xf]
    %v428 = vld [vmem:[#allocation8 + $0x10] sm:$0xf]
    %v429 = vld [vmem:[#allocation8 + $0x14] sm:$0xf]
    %v430 = vld [vmem:[#allocation8 + $0x18] sm:$0xf]
    %v431 = vld [vmem:[#allocation8 + $0x1c] sm:$0xf]
    %v432 = vld [vmem:[#allocation8 + $0x20] sm:$0xf]
    %v433 = vld [vmem:[#allocation8 + $0x24] sm:$0xf]
    %v434 = vld [vmem:[#allocation8 + $0x28] sm:$0xf]
    %v435 = vld [vmem:[#allocation8 + $0x2c] sm:$0xf]
    %v436 = vld [vmem:[#allocation8 + $0x30] sm:$0xf]
    %v437 = vld [vmem:[#allocation8 + $0x34] sm:$0xf]
    %v438 = vld [vmem:[#allocation8 + $0x38] sm:$0xf]
    %v439 = vld [vmem:[#allocation8 + $0x3c] sm:$0xf]
    %v440 = vld [vmem:[%s12] sm:$0x1]
    %v442 = vperm.slane %v440, 0
    %v460 = vunpack.c.l.b16 %v424
    %v461 = vunpack.c.l.b16 %v425
    %v462 = vunpack.c.l.b16 %v426
    %v463 = vunpack.c.l.b16 %v427
    %v464 = vunpack.c.l.b16 %v428
    %v465 = vunpack.c.l.b16 %v429
    %v466 = vunpack.c.l.b16 %v430
    %v467 = vunpack.c.l.b16 %v431
    %v468 = vunpack.c.l.b16 %v432
    %v469 = vunpack.c.l.b16 %v433
    %v470 = vunpack.c.l.b16 %v434
    %v471 = vunpack.c.l.b16 %v435
    %v472 = vunpack.c.l.b16 %v436
    %v473 = vunpack.c.l.b16 %v437
    %v474 = vunpack.c.l.b16 %v438
    %v475 = vunpack.c.l.b16 %v439
    %v476 = vpack.c.b16 %v461, %v460
    %v477 = vpack.c.b16 %v463, %v462
    %v478 = vpack.c.b16 %v465, %v464
    %v479 = vpack.c.b16 %v467, %v466
    %v480 = vpack.c.b16 %v469, %v468
    %v481 = vpack.c.b16 %v471, %v470
    %v482 = vpack.c.b16 %v473, %v472
    %v483 = vpack.c.b16 %v475, %v474
    %492 = vmatpush.bf16.msra.mxu0 %v483
    %493 = vmatpush.bf16.msra.mxu0 %v482
    %494 = vmatpush.bf16.msra.mxu0 %v481
    %495 = vmatpush.bf16.msra.mxu0 %v480
    %496 = vmatpush.bf16.msra.mxu0 %v479
    %497 = vmatpush.bf16.msra.mxu0 %v478
    %498 = vmatpush.bf16.msra.mxu0 %v477
    %499 = vmatpush.bf16.msra.mxu0 %v476
    %500 = vmatmul.bf16.gmra.mxu0 %v423
    %v501 = vpop.f32.mrf.mxu0
    %v502 = vadd.f32 %v442, %v501
    %v503 = vpop.f32.mrf.mxu0
    %504 = vdwg.mxu0
    %505 = vst [vmem:[#allocation10] sm:$0xff] %v502
    // Predicated region
    $region70: #{fwd.1} parent=1 // pred_check
      _
    $region71: #{fwd.1} parent=1 // pred_check_branch
      %507 = sbr.rel (0) target = $region73
    $region72: #{fwd.1} parent=1 // pred_region
      %509 = vsyncadd [#allocation4], 0
      %s511 = sshll.u32 [#allocation10], 4
      %s512 = int_to_ptr.vmem [resolvable:$true] %s511
      %s513 = sshll.u32 %s13, 4
      %s514 = int_to_ptr.hbm [resolvable:$true] %s513
      %516 = dma.vmem_to_hbm [thread:$0]  %s512, 128, %s514, [#allocation4]
    $region73: #{fwd.1} parent=1 // pred_fallthru
      _
    // Predicated region
    $region74: #{fwd.1} parent=1 // pred_check
      _
    $region75: #{fwd.1} parent=1 // pred_check_branch
      %518 = sbr.rel (0) target = $region77
    $region76: #{fwd.1} parent=1 // pred_region
      %520 = dma.done [#allocation4], 128
    $region77: #{fwd.1} parent=1 // pred_fallthru
      _
    %521 = vsyncpa [#allocation3], 1
    %522 = vsyncpa [#allocation6], 1
    %523 = vsyncpa [#allocation9], 1
    %524 = vsyncpa [#allocation4], 1

</llo_original>
